<compile_context>
chip_gen: v7x
topology: tpu7x:2x2x1
jax: 0.10.0
libtpu: 0.0.40
codegen_flags: <defaults>
</compile_context>

<pallas_src>
import functools

import jax
import jax.numpy as jnp
from jax import lax
from jax.experimental import pallas as pl
from jax.experimental.pallas import tpu as pltpu


_CONTRACT_C = (((1,), (1,)), ((), ()))  # contract on C of both operands (NT matmul)


def _simmat_kernel_resident(f_ref, rq_ref, rk_ref, o_ref):
    """Per-batch feature slab resident in VMEM; query/key tiles sliced in-kernel."""
    # f_ref : (1, Np, C)   full per-batch feature slab (re-DMA'd only when b changes)
    # rq_ref: (1, TM, 1)   10 * ||q||^2 column for this row-tile
    # rk_ref: (1, 1, TN)   10 * ||k||^2 lane-major row for this col-tile
    # o_ref : (1, TM, TN)  lane-dense output tile
    tm = o_ref.shape[1]
    tn = o_ref.shape[2]
    i = pl.program_id(1)
    j = pl.program_id(2)
    row0 = pl.multiple_of(i * tm, tm)
    col0 = pl.multiple_of(j * tn, tn)

    xq = f_ref[0, pl.ds(row0, tm), :] * jnp.float32(-20.0)   # fold -2 * 10
    xk = f_ref[0, pl.ds(col0, tn), :]

    gram = lax.dot_general(xq, xk, _CONTRACT_C,
                           precision=lax.Precision.HIGHEST,
                           preferred_element_type=jnp.float32)  # (TM, TN) = -20 * q.k

    # 10*D = 10*rq - 20*gram + 10*rk  ->  3 VALU ops / element.
    o_ref[0] = jnp.maximum(gram + rq_ref[0] + rk_ref[0], 0.0).astype(o_ref.dtype)


def _simmat_kernel_tiled(fq_ref, fk_ref, rq_ref, rk_ref, o_ref):
    """Per-tile query/key feature fetches (used when the slab would not fit VMEM)."""
    xq = fq_ref[0] * jnp.float32(-20.0)                       # (TM, C)
    xk = fk_ref[0]                                            # (TN, C)
    gram = lax.dot_general(xq, xk, _CONTRACT_C,
                           precision=lax.Precision.HIGHEST,
                           preferred_element_type=jnp.float32)
    o_ref[0] = jnp.maximum(gram + rq_ref[0] + rk_ref[0], 0.0).astype(o_ref.dtype)


def _round_up(x: int, m: int) -> int:
    return ((x + m - 1) // m) * m


def _vmem_capacity_bytes() -> int:
    try:
        cap = getattr(pltpu.get_tpu_info(), "vmem_capacity_bytes", None)
        if cap:
            return int(cap)
    except Exception:
        pass
    return 128 << 20  # v5e/v6e default; conservative fallback


@functools.partial(jax.jit, static_argnames=("max_tile", "input_mode", "out_dtype"))
def simmat_model(fsim: jax.Array,
                 *,
                 max_tile: int = 512,
                 input_mode: str = "auto",
                 out_dtype=jnp.float32) -> jax.Array:
    """Pallas equivalent of SimmatModel.forward(Fsim, batch_size).

    max_tile:   output tile edge (512 default; 1024 is worth trying on v7x).
    input_mode: "auto" | "resident" | "tiled"  feature-input strategy.
    out_dtype:  jnp.float32 (reference parity) or jnp.bfloat16 (~2x less
                writeback if downstream tolerates it).
    """
    fsim = fsim.astype(jnp.float32)
    B, N, C = fsim.shape

    # --- Tile selection first, then pad N to a multiple of the tile. -------
    if N >= max_tile:
        tile = max_tile
    else:
        tile = min(_round_up(N, 128), max_tile)
    tile = max(tile, 128)
    tm = tn = tile
    n_pad = _round_up(N, tile)

    if n_pad != N:
        fsim = jnp.pad(fsim, ((0, 0), (0, n_pad - N), (0, 0)))

    # --- Precompute 10 * squared row-norms once (tiny XLA reduce). ---------
    r10 = 10.0 * jnp.sum(fsim * fsim, axis=2)        # (B, n_pad)
    rq10 = r10[:, :, None]                           # (B, n_pad, 1) column view
    rk10 = r10[:, None, :]                           # (B, 1, n_pad) lane-major row

    # --- VMEM accounting (lane dim pads to 128, sublane to 8). -------------
    LANE, SUB, F32 = 128, 8, 4
    c_pad = _round_up(C, LANE)
    out_buf = 2 * tm * tn * F32
    rq_buf = 2 * _round_up(tm, SUB) * LANE * F32
    rk_buf = 2 * SUB * _round_up(tn, LANE) * F32
    slab_buf = 2 * _round_up(n_pad, SUB) * c_pad * F32
    q_buf = 2 * _round_up(tm, SUB) * c_pad * F32
    k_buf = 2 * _round_up(tn, SUB) * c_pad * F32
    headroom = 4 << 20

    resident_need = slab_buf + rq_buf + rk_buf + out_buf + headroom
    tiled_need = q_buf + k_buf + rq_buf + rk_buf + out_buf + headroom

    capacity = _vmem_capacity_bytes()
    if input_mode == "resident":
        use_resident = True
    elif input_mode == "tiled":
        use_resident = False
    else:
        # Resident slab only if it leaves comfortable pipeline headroom
        # (v7x has 64 MiB/TC; v5e/v6e have 128 MiB).
        use_resident = resident_need <= min(capacity // 2, 48 << 20)

    need = resident_need if use_resident else tiled_need
    vmem_limit = int(min(max(need, 32 << 20), capacity - (8 << 20)))

    grid = (B, n_pad // tm, n_pad // tn)
    norm_col_spec = pl.BlockSpec((1, tm, 1), lambda b, i, j: (b, i, 0))
    norm_row_spec = pl.BlockSpec((1, 1, tn), lambda b, i, j: (b, 0, j))
    out_spec = pl.BlockSpec((1, tm, tn), lambda b, i, j: (b, i, j))

    if use_resident:
        kernel = _simmat_kernel_resident
        in_specs = [
            pl.BlockSpec((1, n_pad, C), lambda b, i, j: (b, 0, 0)),  # resident slab
            norm_col_spec,
            norm_row_spec,
        ]
        args = (fsim, rq10, rk10)
    else:
        kernel = _simmat_kernel_tiled
        in_specs = [
            pl.BlockSpec((1, tm, C), lambda b, i, j: (b, i, 0)),     # query tile
            pl.BlockSpec((1, tn, C), lambda b, i, j: (b, j, 0)),     # key tile
            norm_col_spec,
            norm_row_spec,
        ]
        args = (fsim, fsim, rq10, rk10)

    out = pl.pallas_call(
        kernel,
        out_shape=jax.ShapeDtypeStruct((B, n_pad, n_pad), out_dtype),
        grid_spec=pltpu.PrefetchScalarGridSpec(
            num_scalar_prefetch=0,
            grid=grid,
            in_specs=in_specs,
            out_specs=out_spec,
        ),
        compiler_params=pltpu.CompilerParams(
            dimension_semantics=("parallel", "parallel", "parallel"),
            vmem_limit_bytes=vmem_limit,
        ),
    )(*args)

    if n_pad != N:
        out = out[:, :N, :N]
    return out


def _reference(fsim: jax.Array) -> jax.Array:
    r = jnp.sum(fsim * fsim, axis=2)[:, :, None]                  # (B, N, 1)
    d = r - 2.0 * jnp.einsum("bnc,bmc->bnm", fsim, fsim) + jnp.transpose(r, (0, 2, 1))
    return jnp.maximum(10.0 * d, 0.0)


if __name__ == "__main__":
    key = jax.random.PRNGKey(0)

    # Small shape consistent with the module (B batches, N points, C channels).
    B, N, C = 2, 16, 8
    fsim = jax.random.normal(key, (B, N, C), dtype=jnp.float32)
    out = jax.block_until_ready(simmat_model(fsim))
    ref = _reference(fsim)
    assert out.shape == (B, N, N)
    assert jnp.allclose(out, ref, atol=1e-4, rtol=1e-4)

    # Padding path (N not a multiple of 128) + multi-tile grid (force tile=128).
    key2 = jax.random.PRNGKey(1)
    B2, N2, C2 = 2, 300, 8
    fsim2 = jax.random.normal(key2, (B2, N2, C2), dtype=jnp.float32)
    out2 = jax.block_until_ready(simmat_model(fsim2, max_tile=128))
    ref2 = _reference(fsim2)
    assert out2.shape == (B2, N2, N2)
    assert jnp.allclose(out2, ref2, atol=1e-3, rtol=1e-3)

    # Tiled-input variant (the large-N / v7x fallback path).
    out3 = jax.block_until_ready(simmat_model(fsim2, max_tile=128, input_mode="tiled"))
    assert jnp.allclose(out3, ref2, atol=1e-3, rtol=1e-3)

    print("KERNEL_OK")
</pallas_src>

<mosaic_0001>
module attributes {stable_mosaic.version = 11 : i64} {
  func.func @_simmat_kernel_resident(%arg0: i32, %arg1: i32, %arg2: i32, %arg3: memref<1x128x8xf32, #tpu.memory_space<vmem>>, %arg4: memref<1x128x1xf32, #tpu.memory_space<vmem>>, %arg5: memref<1x1x128xf32, #tpu.memory_space<vmem>>, %arg6: memref<1x128x128xf32, #tpu.memory_space<vmem>>) attributes {dimension_semantics = [#tpu.dimension_semantics<parallel>, #tpu.dimension_semantics<parallel>, #tpu.dimension_semantics<parallel>], iteration_bounds = array<i64: 2, 1, 1>, scalar_prefetch = 0 : i64, scratch_operands = 0 : i64, tpu.core_type = #tpu.core_type<tc>, window_params = [{transform_indices = @transform_0, window_bounds = array<i64: 1, 128, 8>}, {transform_indices = @transform_1, window_bounds = array<i64: 1, 128, 1>}, {transform_indices = @transform_2, window_bounds = array<i64: 1, 1, 128>}, {transform_indices = @transform_3, window_bounds = array<i64: 1, 128, 128>}]} {
    %c128_i32 = arith.constant 128 : i32
    %0 = arith.muli %arg1, %c128_i32 : i32
    %1 = tpu.assume_multiple %0, 128 : i32
    %c128_i32_0 = arith.constant 128 : i32
    %2 = arith.muli %arg2, %c128_i32_0 : i32
    %3 = tpu.assume_multiple %2, 128 : i32
    %c0 = arith.constant 0 : index
    %4 = arith.index_cast %1 : i32 to index
    %c0_1 = arith.constant 0 : index
    %5 = vector.load %arg3[%c0, %4, %c0_1] : memref<1x128x8xf32, #tpu.memory_space<vmem>>, vector<1x128x8xf32>
    %6 = vector.shape_cast %5 : vector<1x128x8xf32> to vector<128x8xf32>
    %cst = arith.constant -2.000000e+01 : f32
    %7 = vector.broadcast %cst : f32 to vector<128x8xf32>
    %8 = arith.mulf %6, %7 : vector<128x8xf32>
    %c0_2 = arith.constant 0 : index
    %9 = arith.index_cast %3 : i32 to index
    %c0_3 = arith.constant 0 : index
    %10 = vector.load %arg3[%c0_2, %9, %c0_3] : memref<1x128x8xf32, #tpu.memory_space<vmem>>, vector<1x128x8xf32>
    %11 = vector.shape_cast %10 : vector<1x128x8xf32> to vector<128x8xf32>
    %cst_4 = arith.constant dense<0.000000e+00> : vector<128x128xf32>
    %12 = tpu.matmul %8, %11, %cst_4 {dimension_numbers = #tpu.dot_dimension_numbers<[1], [1], [0], [0], [0, 0, 1, 0], [], []>, precision = #tpu.contract_precision<fp32>} : vector<128x8xf32>, vector<128x8xf32>, vector<128x128xf32> -> vector<128x128xf32>
    %c0_5 = arith.constant 0 : index
    %c0_6 = arith.constant 0 : index
    %c0_7 = arith.constant 0 : index
    %13 = vector.load %arg4[%c0_5, %c0_6, %c0_7] : memref<1x128x1xf32, #tpu.memory_space<vmem>>, vector<1x128x1xf32>
    %14 = vector.shape_cast %13 : vector<1x128x1xf32> to vector<128x1xf32>
    %15 = vector.broadcast %14 : vector<128x1xf32> to vector<128x128xf32>
    %16 = arith.addf %12, %15 : vector<128x128xf32>
    %c0_8 = arith.constant 0 : index
    %c0_9 = arith.constant 0 : index
    %c0_10 = arith.constant 0 : index
    %17 = vector.load %arg5[%c0_8, %c0_9, %c0_10] : memref<1x1x128xf32, #tpu.memory_space<vmem>>, vector<1x1x128xf32>
    %18 = vector.shape_cast %17 : vector<1x1x128xf32> to vector<1x128xf32>
    %19 = vector.broadcast %18 : vector<1x128xf32> to vector<128x128xf32>
    %20 = arith.addf %16, %19 : vector<128x128xf32>
    %cst_11 = arith.constant 0.000000e+00 : f32
    %21 = vector.broadcast %cst_11 : f32 to vector<128x128xf32>
    %22 = arith.maximumf %20, %21 : vector<128x128xf32>
    %c0_12 = arith.constant 0 : index
    %c0_13 = arith.constant 0 : index
    %c0_14 = arith.constant 0 : index
    %23 = vector.load %arg6[%c0_12, %c0_13, %c0_14] : memref<1x128x128xf32, #tpu.memory_space<vmem>>, vector<1x128x128xf32>
    %24 = vector.shape_cast %23 : vector<1x128x128xf32> to vector<128x128xf32>
    %25 = vector.shape_cast %22 : vector<128x128xf32> to vector<1x128x128xf32>
    tpu.vector_store %arg6[%c0_12, %c0_13, %c0_14], %25 {strides = array<i32>} : memref<1x128x128xf32, #tpu.memory_space<vmem>>, vector<1x128x128xf32>,
    return
  }
  func.func @transform_0(%arg0: i32, %arg1: i32, %arg2: i32) -> (i32, i32, i32) {
    %c0_i32 = arith.constant 0 : i32
    %c0_i32_0 = arith.constant 0 : i32
    %c0_i32_1 = arith.constant 0 : i32
    return %arg0, %c0_i32, %c0_i32_0 : i32, i32, i32
  }
  func.func @transform_1(%arg0: i32, %arg1: i32, %arg2: i32) -> (i32, i32, i32) {
    %c0_i32 = arith.constant 0 : i32
    %c0_i32_0 = arith.constant 0 : i32
    return %arg0, %arg1, %c0_i32 : i32, i32, i32
  }
  func.func @transform_2(%arg0: i32, %arg1: i32, %arg2: i32) -> (i32, i32, i32) {
    %c0_i32 = arith.constant 0 : i32
    %c0_i32_0 = arith.constant 0 : i32
    return %arg0, %c0_i32, %arg2 : i32, i32, i32
  }
  func.func @transform_3(%arg0: i32, %arg1: i32, %arg2: i32) -> (i32, i32, i32) {
    %c0_i32 = arith.constant 0 : i32
    return %arg0, %arg1, %arg2 : i32, i32, i32
  }
}

</mosaic_0001>

<llo_original>
// kernel: simmat_model.1
$region0: #{simmat_model.1}
  #allocation0 [shape = 'u32[]', space=smem, size = 0x4, offset = 0x4, fixed_abs, tag = 'smem constant byte address 0x4 - core index']
  #allocation1 [shape = 'u32[144,128]{1,0:T(1,128)}', space=vmem, size = 0x12000, scoped, tag = 'internal scratch']
  %s0 = inlined_call_operand.vmem [shape: f32[2,128,8], index: 0, kind: input, shape index: {}]
  %s1 = inlined_call_operand.vmem [shape: f32[2,128,1], index: 1, kind: input, shape index: {}]
  %s2 = inlined_call_operand.vmem [shape: f32[2,1,128], index: 2, kind: input, shape index: {}]
  %s3 = inlined_call_operand.vmem [shape: f32[2,128,128], index: 3, kind: output, shape index: {}]
  %s4 = sld [smem:[#allocation0]]
  $region45: #{simmat_model.1} parent=0
    _
  %s6 = ssub.s32 1, %s4
  %s7 = scalar_select 0, %s6, %s4
  loop: start=0, step=1, limit=4
  $region2: #{simmat_model.1} parent=0 // loop_pre_header
    _
  $region3: #{simmat_model.1} parent=0 // loop_header
    %s9 = sphi 0, %s13
    %p10 = scmp.ge.s32.totalorder %s9, 4
    %s16 = sphi 0, %s35
    %s17 = sphi 0, %s31
    %s18 = sphi 0, %s27
    %s19 = sphi 0, %s16
    %s20 = sphi 0, %s17
    %s21 = sphi 0, %s18
    %s22 = sphi 0, %s19
    %s23 = sphi 0, %s20
    %s24 = sphi 0, %s21
    %s38 = sphi 0, %s40
    %s41 = sphi 0, %s38
    %s42 = sphi 0, %s41
    %s58 = sphi 0, %s42
    %s66 = sphi 0, %s68
    %s69 = sphi 0, %s66
    %s70 = sphi 0, %s69
    %s86 = sphi 0, %s70
    %s94 = sphi 0, %s96
    %s97 = sphi 0, %s94
    %s98 = sphi 0, %s97
    %s114 = sphi 0, %s98
    %s124 = sphi 0, %s126
    %s127 = sphi 0, %s124
    %s128 = sphi 0, %s127
    %s144 = sphi 0, %s128
  $region4: #{simmat_model.1} parent=0 // loop_header_branch
    %12 = sbr.rel (%p10) target = $region8
  $region5: #{simmat_model.1} parent=0 // loop_body
    %s14 = ssub.s32 %s9, 1
    %s15 = ssub.s32 %s9, 2
    %s25 = sadd.s32 1, %s18
    %p26 = scmp.ge.s32.totalorder %s25, 1
    %s27 = scalar_select %p26, 0, %s25
    %s28 = sadd.s32 1, %s17
    %s29 = scalar_select %p26, %s28, %s17
    %p30 = scmp.ge.s32.totalorder %s29, 1
    %s31 = scalar_select %p30, 0, %s29
    %s32 = sadd.s32 1, %s16
    %s33 = scalar_select %p30, %s32, %s16
    %p34 = scmp.ge.s32.totalorder %s33, 2
    %s35 = scalar_select %p34, 0, %s33
    %s36 = ssub.s32 %s16, %s35
    %p37 = scmp.eq.s32.totalorder %s36, 0
    %s39 = sadd.s32 %s38, 1
    %s40 = scalar_select %p37, %s38, %s39
    %p43 = pneg %p37
    %p44 = scmp.eq.s32.totalorder %s9, 1
    %p45 = por %p43, %p44
    %p46 = scmp.ne.s32.totalorder %s38, %s41
    %p47 = scmp.eq.s32.totalorder %s9, 0
    %p48 = por %p46, %p47
    %p49 = scmp.ne.s32.totalorder %s38, %s41
    %p50 = scmp.eq.s32.totalorder %s14, 1
    %p51 = por %p49, %p50
    %p52 = scmp.ne.s32.totalorder %s41, %s42
    %p53 = scmp.eq.s32.totalorder %s14, 0
    %p54 = por %p52, %p53
    %p55 = scmp.ne.s32.totalorder %s41, %s42
    %p56 = scmp.eq.s32.totalorder %s15, 1
    %p57 = por %p55, %p56
    %p59 = scmp.ne.s32.totalorder %s42, %s58
    %p60 = scmp.eq.s32.totalorder %s15, 0
    %p61 = por %p59, %p60
    %s62 = ssub.s32 %s16, %s35
    %s63 = ssub.s32 %s17, %s31
    %s64 = sor.u32 %s62, %s63
    %p65 = scmp.eq.s32.totalorder %s64, 0
    %s67 = sadd.s32 %s66, 1
    %s68 = scalar_select %p65, %s66, %s67
    %p71 = pneg %p65
    %p72 = scmp.eq.s32.totalorder %s9, 1
    %p73 = por %p71, %p72
    %p74 = scmp.ne.s32.totalorder %s66, %s69
    %p75 = scmp.eq.s32.totalorder %s9, 0
    %p76 = por %p74, %p75
    %p77 = scmp.ne.s32.totalorder %s66, %s69
    %p78 = scmp.eq.s32.totalorder %s14, 1
    %p79 = por %p77, %p78
    %p80 = scmp.ne.s32.totalorder %s69, %s70
    %p81 = scmp.eq.s32.totalorder %s14, 0
    %p82 = por %p80, %p81
    %p83 = scmp.ne.s32.totalorder %s69, %s70
    %p84 = scmp.eq.s32.totalorder %s15, 1
    %p85 = por %p83, %p84
    %p87 = scmp.ne.s32.totalorder %s70, %s86
    %p88 = scmp.eq.s32.totalorder %s15, 0
    %p89 = por %p87, %p88
    %s90 = ssub.s32 %s16, %s35
    %s91 = ssub.s32 %s18, %s27
    %s92 = sor.u32 %s90, %s91
    %p93 = scmp.eq.s32.totalorder %s92, 0
    %s95 = sadd.s32 %s94, 1
    %s96 = scalar_select %p93, %s94, %s95
    %p99 = pneg %p93
    %p100 = scmp.eq.s32.totalorder %s9, 1
    %p101 = por %p99, %p100
    %p102 = scmp.ne.s32.totalorder %s94, %s97
    %p103 = scmp.eq.s32.totalorder %s9, 0
    %p104 = por %p102, %p103
    %p105 = scmp.ne.s32.totalorder %s94, %s97
    %p106 = scmp.eq.s32.totalorder %s14, 1
    %p107 = por %p105, %p106
    %p108 = scmp.ne.s32.totalorder %s97, %s98
    %p109 = scmp.eq.s32.totalorder %s14, 0
    %p110 = por %p108, %p109
    %p111 = scmp.ne.s32.totalorder %s97, %s98
    %p112 = scmp.eq.s32.totalorder %s15, 1
    %p113 = por %p111, %p112
    %p115 = scmp.ne.s32.totalorder %s98, %s114
    %p116 = scmp.eq.s32.totalorder %s15, 0
    %p117 = por %p115, %p116
    %s118 = ssub.s32 %s16, %s35
    %s119 = ssub.s32 %s17, %s31
    %s120 = sor.u32 %s118, %s119
    %s121 = ssub.s32 %s18, %s27
    %s122 = sor.u32 %s120, %s121
    %p123 = scmp.eq.s32.totalorder %s122, 0
    %s125 = sadd.s32 %s124, 1
    %s126 = scalar_select %p123, %s124, %s125
    %p129 = pneg %p123
    %p130 = scmp.eq.s32.totalorder %s9, 1
    %p131 = por %p129, %p130
    %p132 = scmp.ne.s32.totalorder %s124, %s127
    %p133 = scmp.eq.s32.totalorder %s9, 0
    %p134 = por %p132, %p133
    %p135 = scmp.ne.s32.totalorder %s124, %s127
    %p136 = scmp.eq.s32.totalorder %s14, 1
    %p137 = por %p135, %p136
    %p138 = scmp.ne.s32.totalorder %s127, %s128
    %p139 = scmp.eq.s32.totalorder %s14, 0
    %p140 = por %p138, %p139
    %p141 = scmp.ne.s32.totalorder %s127, %s128
    %p142 = scmp.eq.s32.totalorder %s15, 1
    %p143 = por %p141, %p142
    %p145 = scmp.ne.s32.totalorder %s128, %s144
    %p146 = scmp.eq.s32.totalorder %s15, 0
    %p147 = por %p145, %p146
    %p148 = scmp.le.s32.totalorder 1, %s9
    %p149 = scmp.lt.s32.totalorder %s9, 3
    %p150 = pnand %p148, %p149
    %p151 = pneg %p150
    // Predicated region
    $region9: #{simmat_model.1} parent=5 // pred_check
      _
    $region10: #{simmat_model.1} parent=5 // pred_check_branch
      %153 = sbr.rel (%p150) target = $region12
    $region11: #{simmat_model.1} parent=5 // pred_region
      %s154 = ssub.s32 %s9, 1
    $region12: #{simmat_model.1} parent=5 // pred_fallthru
      _
    %p155 = scmp.lt.s32.totalorder %s9, 2
    // Predicated region
    $region13: #{simmat_model.1} parent=5 // pred_check
      %p156 = pneg %p155
    $region14: #{simmat_model.1} parent=5 // pred_check_branch
      %158 = sbr.rel (%p156) target = $region16
    $region15: #{simmat_model.1} parent=5 // pred_region
      // Predicated region
      $region17: #{simmat_model.1} parent=15 // pred_check
        %p159 = pneg %p48
      $region18: #{simmat_model.1} parent=15 // pred_check_branch
        %161 = sbr.rel (%p159) target = $region20
      $region19: #{simmat_model.1} parent=15 // pred_region
        %p162 = scmp.lt.s32.totalorder %s16, 1
        %s163 = scalar_select %p162, %s16, 1
        %s164 = smul.addr %s163, 16
        %s165 = smul.addr %s164, 8
        %s166 = scalar_lea.vmem %s0, %s165
      $region20: #{simmat_model.1} parent=15 // pred_fallthru
        _
      // Predicated region
      $region21: #{simmat_model.1} parent=15 // pred_check
        %p167 = pneg %p76
      $region22: #{simmat_model.1} parent=15 // pred_check_branch
        %169 = sbr.rel (%p167) target = $region24
      $region23: #{simmat_model.1} parent=15 // pred_region
        %s170 = smul.u32 16, %s17
        %p171 = scmp.lt.s32.totalorder %s16, 1
        %s172 = scalar_select %p171, %s16, 1
        %p173 = scmp.lt.s32.totalorder %s170, 15
        %s174 = scalar_select %p173, %s170, 15
        %s175 = smul.addr %s172, 16
        %s176 = sadd.s32 %s174, %s175
        %s177 = smul.addr %s176, 8
        %s178 = scalar_lea.vmem %s1, %s177
        %s179 = smul.u32 16, %s17
      $region24: #{simmat_model.1} parent=15 // pred_fallthru
        _
      // Predicated region
      $region25: #{simmat_model.1} parent=15 // pred_check
        %p180 = pneg %p104
      $region26: #{simmat_model.1} parent=15 // pred_check_branch
        %182 = sbr.rel (%p180) target = $region28
      $region27: #{simmat_model.1} parent=15 // pred_region
        %p183 = scmp.lt.s32.totalorder %s16, 1
        %s184 = scalar_select %p183, %s16, 1
        %p185 = scmp.lt.s32.totalorder %s18, 0
        %s186 = scalar_select %p185, %s18, 0
        %s187 = sadd.s32 %s186, %s184
        %s188 = scalar_lea.vmem %s2, %s187
      $region28: #{simmat_model.1} parent=15 // pred_fallthru
        _
    $region16: #{simmat_model.1} parent=5 // pred_fallthru
      _
    %p189 = scmp.le.s32.totalorder 1, %s9
    %p190 = scmp.lt.s32.totalorder %s9, 3
    %p191 = pnand %p189, %p190
    %p192 = pneg %p191
    // Predicated region
    $region29: #{simmat_model.1} parent=5 // pred_check
      _
    $region30: #{simmat_model.1} parent=5 // pred_check_branch
      %194 = sbr.rel (%p191) target = $region32
    $region31: #{simmat_model.1} parent=5 // pred_region
      %s195 = ssub.s32 %s9, 1
      %p196 = scmp.lt.s32.totalorder %s19, 1
      %s197 = scalar_select %p196, %s19, 1
      %s198 = smul.addr %s197, 16
      %s199 = smul.addr %s198, 8
      %s200 = scalar_lea.vmem %s0, %s199
      %p201 = pneg %p54
      %p202 = pneg %p51
      %s203 = smul.u32 16, %s20
      %p204 = scmp.lt.s32.totalorder %s19, 1
      %s205 = scalar_select %p204, %s19, 1
      %p206 = scmp.lt.s32.totalorder %s203, 15
      %s207 = scalar_select %p206, %s203, 15
      %s208 = smul.addr %s205, 16
      %s209 = sadd.s32 %s207, %s208
      %s210 = smul.addr %s209, 8
      %s211 = scalar_lea.vmem %s1, %s210
      %p212 = pneg %p82
      %p213 = pneg %p79
      %p214 = scmp.lt.s32.totalorder %s19, 1
      %s215 = scalar_select %p214, %s19, 1
      %p216 = scmp.lt.s32.totalorder %s21, 0
      %s217 = scalar_select %p216, %s21, 0
      %s218 = sadd.s32 %s217, %s215
      %s219 = scalar_lea.vmem %s2, %s218
      %p220 = pneg %p110
      %p221 = pneg %p107
      %p222 = pneg %p140
      %p223 = pneg %p137
      %s224 = smul.u32 16, %s20
      %p225 = scmp.lt.s32.totalorder %s19, 1
      %s226 = scalar_select %p225, %s19, 1
      %p227 = scmp.lt.s32.totalorder %s224, 15
      %s228 = scalar_select %p227, %s224, 15
      %p229 = scmp.lt.s32.totalorder %s21, 0
      %s230 = scalar_select %p229, %s21, 0
      %s231 = sadd.s32 %s230, %s228
      %s232 = smul.addr %s226, 16
      %s233 = sadd.s32 %s231, %s232
      %s234 = smul.addr %s233, 8
      %s235 = scalar_lea.vmem %s3, %s234
      %p236 = scmp.lt.s32.totalorder %s19, 1
      %s237 = scalar_select %p236, %s19, 1
      %s238 = smul.addr %s237, 16
      %s239 = smul.addr %s238, 8
      %s240 = scalar_lea.vmem %s0, %s239
      %s241 = smul.u32 16, %s20
      %p242 = scmp.lt.s32.totalorder %s19, 1
      %s243 = scalar_select %p242, %s19, 1
      %p244 = scmp.lt.s32.totalorder %s241, 15
      %s245 = scalar_select %p244, %s241, 15
      %s246 = smul.addr %s243, 16
      %s247 = sadd.s32 %s245, %s246
      %s248 = smul.addr %s247, 8
      %s249 = scalar_lea.vmem %s1, %s248
      %s250 = smul.u32 16, %s20
      %p251 = scmp.lt.s32.totalorder %s19, 1
      %s252 = scalar_select %p251, %s19, 1
      %p253 = scmp.lt.s32.totalorder %s21, 0
      %s254 = scalar_select %p253, %s21, 0
      %s255 = sadd.s32 %s254, %s252
      %s256 = scalar_lea.vmem %s2, %s255
      %s257 = smul.u32 16, %s20
      %p258 = scmp.lt.s32.totalorder %s19, 1
      %s259 = scalar_select %p258, %s19, 1
      %p260 = scmp.lt.s32.totalorder %s257, 15
      %s261 = scalar_select %p260, %s257, 15
      %p262 = scmp.lt.s32.totalorder %s21, 0
      %s263 = scalar_select %p262, %s21, 0
      %s264 = sadd.s32 %s263, %s261
      %s265 = smul.addr %s259, 16
      %s266 = sadd.s32 %s264, %s265
      %s267 = smul.addr %s266, 8
      %s268 = scalar_lea.vmem %s3, %s267
      %s269 = smul.u32 16, %s20
      %s270 = smul.u32 %s20, 128
      %s271 = smul.u32 %s21, 128
      %s272 = scalar_lea.vmem %s240, %s270
      %v273 = vld [vmem:[%s272] sm:$0xff]
      %v274 = vld [vmem:[%s272 + $0x8] sm:$0xff]
      %v275 = vld [vmem:[%s272 + $0x10] sm:$0xff]
      %v276 = vld [vmem:[%s272 + $0x18] sm:$0xff]
      %v277 = vld [vmem:[%s272 + $0x20] sm:$0xff]
      %v278 = vld [vmem:[%s272 + $0x28] sm:$0xff]
      %v279 = vld [vmem:[%s272 + $0x30] sm:$0xff]
      %v280 = vld [vmem:[%s272 + $0x38] sm:$0xff]
      %v281 = vld [vmem:[%s272 + $0x40] sm:$0xff]
      %v282 = vld [vmem:[%s272 + $0x48] sm:$0xff]
      %v283 = vld [vmem:[%s272 + $0x50] sm:$0xff]
      %v284 = vld [vmem:[%s272 + $0x58] sm:$0xff]
      %v285 = vld [vmem:[%s272 + $0x60] sm:$0xff]
      %v286 = vld [vmem:[%s272 + $0x68] sm:$0xff]
      %v287 = vld [vmem:[%s272 + $0x70] sm:$0xff]
      %v288 = vld [vmem:[%s272 + $0x78] sm:$0xff]
      %v289 = vmul.f32 %v273, -20.0
      %v290 = vmul.f32 %v274, -20.0
      %v291 = vmul.f32 %v275, -20.0
      %v292 = vmul.f32 %v276, -20.0
      %v293 = vmul.f32 %v277, -20.0
      %v294 = vmul.f32 %v278, -20.0
      %v295 = vmul.f32 %v279, -20.0
      %v296 = vmul.f32 %v280, -20.0
      %v297 = vmul.f32 %v281, -20.0
      %v298 = vmul.f32 %v282, -20.0
      %v299 = vmul.f32 %v283, -20.0
      %v300 = vmul.f32 %v284, -20.0
      %v301 = vmul.f32 %v285, -20.0
      %v302 = vmul.f32 %v286, -20.0
      %v303 = vmul.f32 %v287, -20.0
      %v304 = vmul.f32 %v288, -20.0
      %s305 = scalar_lea.vmem %s240, %s271
      %v306 = vld [vmem:[%s305] sm:$0xff]
      %v307 = vld [vmem:[%s305 + $0x8] sm:$0xff]
      %v308 = vld [vmem:[%s305 + $0x10] sm:$0xff]
      %v309 = vld [vmem:[%s305 + $0x18] sm:$0xff]
      %v310 = vld [vmem:[%s305 + $0x20] sm:$0xff]
      %v311 = vld [vmem:[%s305 + $0x28] sm:$0xff]
      %v312 = vld [vmem:[%s305 + $0x30] sm:$0xff]
      %v313 = vld [vmem:[%s305 + $0x38] sm:$0xff]
      %v314 = vld [vmem:[%s305 + $0x40] sm:$0xff]
      %v315 = vld [vmem:[%s305 + $0x48] sm:$0xff]
      %v316 = vld [vmem:[%s305 + $0x50] sm:$0xff]
      %v317 = vld [vmem:[%s305 + $0x58] sm:$0xff]
      %v318 = vld [vmem:[%s305 + $0x60] sm:$0xff]
      %v319 = vld [vmem:[%s305 + $0x68] sm:$0xff]
      %v320 = vld [vmem:[%s305 + $0x70] sm:$0xff]
      %v321 = vld [vmem:[%s305 + $0x78] sm:$0xff]
      %v322 = vld [vmem:[%s249] sm:$0xff]
      %v323 = vld [vmem:[%s249 + $0x8] sm:$0xff]
      %v324 = vld [vmem:[%s249 + $0x10] sm:$0xff]
      %v325 = vld [vmem:[%s249 + $0x18] sm:$0xff]
      %v326 = vld [vmem:[%s249 + $0x20] sm:$0xff]
      %v327 = vld [vmem:[%s249 + $0x28] sm:$0xff]
      %v328 = vld [vmem:[%s249 + $0x30] sm:$0xff]
      %v329 = vld [vmem:[%s249 + $0x38] sm:$0xff]
      %v330 = vld [vmem:[%s249 + $0x40] sm:$0xff]
      %v331 = vld [vmem:[%s249 + $0x48] sm:$0xff]
      %v332 = vld [vmem:[%s249 + $0x50] sm:$0xff]
      %v333 = vld [vmem:[%s249 + $0x58] sm:$0xff]
      %v334 = vld [vmem:[%s249 + $0x60] sm:$0xff]
      %v335 = vld [vmem:[%s249 + $0x68] sm:$0xff]
      %v336 = vld [vmem:[%s249 + $0x70] sm:$0xff]
      %v337 = vld [vmem:[%s249 + $0x78] sm:$0xff]
      %339 = vset.pattern.permute.xlu0 0
      %340 = vperm.xlu0 %339, %v322
      %v341 = vpop.permute.xlu0 %340
      %344 = vset.pattern.permute.xlu0 0
      %345 = vperm.xlu0 %344, %v323
      %v346 = vpop.permute.xlu0 %345
      %349 = vset.pattern.permute.xlu0 0
      %350 = vperm.xlu0 %349, %v324
      %v351 = vpop.permute.xlu0 %350
      %354 = vset.pattern.permute.xlu0 0
      %355 = vperm.xlu0 %354, %v325
      %v356 = vpop.permute.xlu0 %355
      %359 = vset.pattern.permute.xlu0 0
      %360 = vperm.xlu0 %359, %v326
      %v361 = vpop.permute.xlu0 %360
      %364 = vset.pattern.permute.xlu0 0
      %365 = vperm.xlu0 %364, %v327
      %v366 = vpop.permute.xlu0 %365
      %369 = vset.pattern.permute.xlu0 0
      %370 = vperm.xlu0 %369, %v328
      %v371 = vpop.permute.xlu0 %370
      %374 = vset.pattern.permute.xlu0 0
      %375 = vperm.xlu0 %374, %v329
      %v376 = vpop.permute.xlu0 %375
      %379 = vset.pattern.permute.xlu0 0
      %380 = vperm.xlu0 %379, %v330
      %v381 = vpop.permute.xlu0 %380
      %384 = vset.pattern.permute.xlu0 0
      %385 = vperm.xlu0 %384, %v331
      %v386 = vpop.permute.xlu0 %385
      %389 = vset.pattern.permute.xlu0 0
      %390 = vperm.xlu0 %389, %v332
      %v391 = vpop.permute.xlu0 %390
      %394 = vset.pattern.permute.xlu0 0
      %395 = vperm.xlu0 %394, %v333
      %v396 = vpop.permute.xlu0 %395
      %399 = vset.pattern.permute.xlu0 0
      %400 = vperm.xlu0 %399, %v334
      %v401 = vpop.permute.xlu0 %400
      %404 = vset.pattern.permute.xlu0 0
      %405 = vperm.xlu0 %404, %v335
      %v406 = vpop.permute.xlu0 %405
      %409 = vset.pattern.permute.xlu0 0
      %410 = vperm.xlu0 %409, %v336
      %v411 = vpop.permute.xlu0 %410
      %414 = vset.pattern.permute.xlu0 0
      %415 = vperm.xlu0 %414, %v337
      %v416 = vpop.permute.xlu0 %415
      %vm418 = vcmask 64512
      %v420 = vsel %vm418, %v289, 0
      %v423 = vsel %vm418, %v290, 0
      %v426 = vsel %vm418, %v291, 0
      %v429 = vsel %vm418, %v292, 0
      %v432 = vsel %vm418, %v293, 0
      %v435 = vsel %vm418, %v294, 0
      %v438 = vsel %vm418, %v295, 0
      %v441 = vsel %vm418, %v296, 0
      %v444 = vsel %vm418, %v297, 0
      %v447 = vsel %vm418, %v298, 0
      %v450 = vsel %vm418, %v299, 0
      %v453 = vsel %vm418, %v300, 0
      %v456 = vsel %vm418, %v301, 0
      %v459 = vsel %vm418, %v302, 0
      %v462 = vsel %vm418, %v303, 0
      %v465 = vsel %vm418, %v304, 0
      %v468 = vsel %vm418, %v306, 0
      %v471 = vsel %vm418, %v307, 0
      %v474 = vsel %vm418, %v308, 0
      %v477 = vsel %vm418, %v309, 0
      %v480 = vsel %vm418, %v310, 0
      %v483 = vsel %vm418, %v311, 0
      %v486 = vsel %vm418, %v312, 0
      %v489 = vsel %vm418, %v313, 0
      %v492 = vsel %vm418, %v314, 0
      %v495 = vsel %vm418, %v315, 0
      %v498 = vsel %vm418, %v316, 0
      %v501 = vsel %vm418, %v317, 0
      %v504 = vsel %vm418, %v318, 0
      %v507 = vsel %vm418, %v319, 0
      %v510 = vsel %vm418, %v320, 0
      %v513 = vsel %vm418, %v321, 0
      %515 = vmatprep.subr.mxu0 0.0
      %v516 = vand.u32 %v468, 4294901760
      %517 = vmatpush1.xpose.msra.mxu0 %v516
      %518 = vmatprep.subr.mxu0 0.0
      %v519 = vand.u32 %v471, 4294901760
      %520 = vmatpush1.xpose.msra.mxu0 %v519
      %521 = vmatprep.subr.mxu0 0.0
      %v522 = vand.u32 %v474, 4294901760
      %523 = vmatpush1.xpose.msra.mxu0 %v522
      %524 = vmatprep.subr.mxu0 0.0
      %v525 = vand.u32 %v477, 4294901760
      %526 = vmatpush1.xpose.msra.mxu0 %v525
      %527 = vmatprep.subr.mxu0 0.0
      %v528 = vand.u32 %v480, 4294901760
      %529 = vmatpush1.xpose.msra.mxu0 %v528
      %530 = vmatprep.subr.mxu0 0.0
      %v531 = vand.u32 %v483, 4294901760
      %532 = vmatpush1.xpose.msra.mxu0 %v531
      %533 = vmatprep.subr.mxu0 0.0
      %v534 = vand.u32 %v486, 4294901760
      %535 = vmatpush1.xpose.msra.mxu0 %v534
      %536 = vmatprep.subr.mxu0 0.0
      %v537 = vand.u32 %v489, 4294901760
      %538 = vmatpush1.xpose.msra.mxu0 %v537
      %539 = vmatprep.subr.mxu0 0.0
      %v540 = vand.u32 %v492, 4294901760
      %541 = vmatpush1.xpose.msra.mxu0 %v540
      %542 = vmatprep.subr.mxu0 0.0
      %v543 = vand.u32 %v495, 4294901760
      %544 = vmatpush1.xpose.msra.mxu0 %v543
      %545 = vmatprep.subr.mxu0 0.0
      %v546 = vand.u32 %v498, 4294901760
      %547 = vmatpush1.xpose.msra.mxu0 %v546
      %548 = vmatprep.subr.mxu0 0.0
      %v549 = vand.u32 %v501, 4294901760
      %550 = vmatpush1.xpose.msra.mxu0 %v549
      %551 = vmatprep.subr.mxu0 0.0
      %v552 = vand.u32 %v504, 4294901760
      %553 = vmatpush1.xpose.msra.mxu0 %v552
      %554 = vmatprep.subr.mxu0 0.0
      %v555 = vand.u32 %v507, 4294901760
      %556 = vmatpush1.xpose.msra.mxu0 %v555
      %557 = vmatprep.subr.mxu0 0.0
      %v558 = vand.u32 %v510, 4294901760
      %559 = vmatpush1.xpose.msra.mxu0 %v558
      %560 = vmatprep.subr.mxu0 0.0
      %v561 = vand.u32 %v513, 4294901760
      %562 = vmatpush1.xpose.msra.mxu0 %v561
      %563 = vmatprep.subr.mxu0 0.0
      %564 = vmatpush1.xpose.msra.mxu0 0.0
      %565 = vmatprep.subr.mxu0 0.0
      %566 = vmatpush1.xpose.msra.mxu0 0.0
      %567 = vmatprep.subr.mxu0 0.0
      %568 = vmatpush1.xpose.msra.mxu0 0.0
      %569 = vmatprep.subr.mxu0 0.0
      %570 = vmatpush1.xpose.msra.mxu0 0.0
      %571 = vmatprep.subr.mxu0 0.0
      %572 = vmatpush1.xpose.msra.mxu0 0.0
      %573 = vmatprep.subr.mxu0 0.0
      %574 = vmatpush1.xpose.msra.mxu0 0.0
      %575 = vmatprep.subr.mxu0 0.0
      %576 = vmatpush1.xpose.msra.mxu0 0.0
      %577 = vmatprep.subr.mxu0 0.0
      %578 = vmatpush1.xpose.msra.mxu0 0.0
      %579 = vmatprep.subr.mxu0 0.0
      %580 = vmatpush1.xpose.msra.mxu0 0.0
      %581 = vmatprep.subr.mxu0 0.0
      %582 = vmatpush1.xpose.msra.mxu0 0.0
      %583 = vmatprep.subr.mxu0 0.0
      %584 = vmatpush1.xpose.msra.mxu0 0.0
      %585 = vmatprep.subr.mxu0 0.0
      %586 = vmatpush1.xpose.msra.mxu0 0.0
      %587 = vmatprep.subr.mxu0 0.0
      %588 = vmatpush1.xpose.msra.mxu0 0.0
      %589 = vmatprep.subr.mxu0 0.0
      %590 = vmatpush1.xpose.msra.mxu0 0.0
      %591 = vmatprep.subr.mxu0 0.0
      %592 = vmatpush1.xpose.msra.mxu0 0.0
      %593 = vmatprep.subr.mxu0 0.0
      %594 = vmatpush1.xpose.msra.mxu0 0.0
      %595 = vmatprep.mubr.f32.mxu0 0.0
      %v596 = vand.u32 %v420, 4294901760
      %v597 = vsub.f32 %v420, %v596
      %v598 = vand.u32 %v597, 4294901760
      %v599 = vsub.f32 %v597, %v598
      %v600 = vand.u32 %v599, 4294901760
      %601 = vmatmul.mubr.f32.gmra.mrb[0].mxu0 %v600
      %v602 = vpop.f32.mrb[0].mxu0
      %v603 = vadd.f32 %v341, %v602
      %v604 = vpop.f32.mrb[0].mxu0
      %605 = vmatprep.mubr.f32.mxu0 0.0
      %v606 = vand.u32 %v423, 4294901760
      %v607 = vsub.f32 %v423, %v606
      %v608 = vand.u32 %v607, 4294901760
      %v609 = vsub.f32 %v607, %v608
      %v610 = vand.u32 %v609, 4294901760
      %611 = vmatmul.mubr.f32.gmra.mrb[0].mxu0 %v610
      %v612 = vpop.f32.mrb[0].mxu0
      %v613 = vadd.f32 %v346, %v612
      %v614 = vpop.f32.mrb[0].mxu0
      %615 = vmatprep.mubr.f32.mxu0 0.0
      %v616 = vand.u32 %v426, 4294901760
      %v617 = vsub.f32 %v426, %v616
      %v618 = vand.u32 %v617, 4294901760
      %v619 = vsub.f32 %v617, %v618
      %v620 = vand.u32 %v619, 4294901760
      %621 = vmatmul.mubr.f32.gmra.mrb[0].mxu0 %v620
      %v622 = vpop.f32.mrb[0].mxu0
      %v623 = vadd.f32 %v351, %v622
      %v624 = vpop.f32.mrb[0].mxu0
      %625 = vmatprep.mubr.f32.mxu0 0.0
      %v626 = vand.u32 %v429, 4294901760
      %v627 = vsub.f32 %v429, %v626
      %v628 = vand.u32 %v627, 4294901760
      %v629 = vsub.f32 %v627, %v628
      %v630 = vand.u32 %v629, 4294901760
      %631 = vmatmul.mubr.f32.gmra.mrb[0].mxu0 %v630
      %v632 = vpop.f32.mrb[0].mxu0
      %v633 = vadd.f32 %v356, %v632
      %v634 = vpop.f32.mrb[0].mxu0
      %635 = vmatprep.mubr.f32.mxu0 0.0
      %v636 = vand.u32 %v432, 4294901760
      %v637 = vsub.f32 %v432, %v636
      %v638 = vand.u32 %v637, 4294901760
      %v639 = vsub.f32 %v637, %v638
      %v640 = vand.u32 %v639, 4294901760
      %641 = vmatmul.mubr.f32.gmra.mrb[0].mxu0 %v640
      %v642 = vpop.f32.mrb[0].mxu0
      %v643 = vadd.f32 %v361, %v642
      %v644 = vpop.f32.mrb[0].mxu0
      %645 = vmatprep.mubr.f32.mxu0 0.0
      %v646 = vand.u32 %v435, 4294901760
      %v647 = vsub.f32 %v435, %v646
      %v648 = vand.u32 %v647, 4294901760
      %v649 = vsub.f32 %v647, %v648
      %v650 = vand.u32 %v649, 4294901760
      %651 = vmatmul.mubr.f32.gmra.mrb[0].mxu0 %v650
      %v652 = vpop.f32.mrb[0].mxu0
      %v653 = vadd.f32 %v366, %v652
      %v654 = vpop.f32.mrb[0].mxu0
      %655 = vmatprep.mubr.f32.mxu0 0.0
      %v656 = vand.u32 %v438, 4294901760
      %v657 = vsub.f32 %v438, %v656
      %v658 = vand.u32 %v657, 4294901760
      %v659 = vsub.f32 %v657, %v658
      %v660 = vand.u32 %v659, 4294901760
      %661 = vmatmul.mubr.f32.gmra.mrb[0].mxu0 %v660
      %v662 = vpop.f32.mrb[0].mxu0
      %v663 = vadd.f32 %v371, %v662
      %v664 = vpop.f32.mrb[0].mxu0
      %665 = vmatprep.mubr.f32.mxu0 0.0
      %v666 = vand.u32 %v441, 4294901760
      %v667 = vsub.f32 %v441, %v666
      %v668 = vand.u32 %v667, 4294901760
      %v669 = vsub.f32 %v667, %v668
      %v670 = vand.u32 %v669, 4294901760
      %671 = vmatmul.mubr.f32.gmra.mrb[0].mxu0 %v670
      %v672 = vpop.f32.mrb[0].mxu0
      %v673 = vadd.f32 %v376, %v672
      %v674 = vpop.f32.mrb[0].mxu0
      %675 = vmatprep.mubr.f32.mxu0 0.0
      %v676 = vand.u32 %v444, 4294901760
      %v677 = vsub.f32 %v444, %v676
      %v678 = vand.u32 %v677, 4294901760
      %v679 = vsub.f32 %v677, %v678
      %v680 = vand.u32 %v679, 4294901760
      %681 = vmatmul.mubr.f32.gmra.mrb[0].mxu0 %v680
      %v682 = vpop.f32.mrb[0].mxu0
      %v683 = vadd.f32 %v381, %v682
      %v684 = vpop.f32.mrb[0].mxu0
      %685 = vmatprep.mubr.f32.mxu0 0.0
      %v686 = vand.u32 %v447, 4294901760
      %v687 = vsub.f32 %v447, %v686
      %v688 = vand.u32 %v687, 4294901760
      %v689 = vsub.f32 %v687, %v688
      %v690 = vand.u32 %v689, 4294901760
      %691 = vmatmul.mubr.f32.gmra.mrb[0].mxu0 %v690
      %v692 = vpop.f32.mrb[0].mxu0
      %v693 = vadd.f32 %v386, %v692
      %v694 = vpop.f32.mrb[0].mxu0
      %695 = vmatprep.mubr.f32.mxu0 0.0
      %v696 = vand.u32 %v450, 4294901760
      %v697 = vsub.f32 %v450, %v696
      %v698 = vand.u32 %v697, 4294901760
      %v699 = vsub.f32 %v697, %v698
      %v700 = vand.u32 %v699, 4294901760
      %701 = vmatmul.mubr.f32.gmra.mrb[0].mxu0 %v700
      %v702 = vpop.f32.mrb[0].mxu0
      %v703 = vadd.f32 %v391, %v702
      %v704 = vpop.f32.mrb[0].mxu0
      %705 = vmatprep.mubr.f32.mxu0 0.0
      %v706 = vand.u32 %v453, 4294901760
      %v707 = vsub.f32 %v453, %v706
      %v708 = vand.u32 %v707, 4294901760
      %v709 = vsub.f32 %v707, %v708
      %v710 = vand.u32 %v709, 4294901760
      %711 = vmatmul.mubr.f32.gmra.mrb[0].mxu0 %v710
      %v712 = vpop.f32.mrb[0].mxu0
      %v713 = vadd.f32 %v396, %v712
      %v714 = vpop.f32.mrb[0].mxu0
      %715 = vmatprep.mubr.f32.mxu0 0.0
      %v716 = vand.u32 %v456, 4294901760
      %v717 = vsub.f32 %v456, %v716
      %v718 = vand.u32 %v717, 4294901760
      %v719 = vsub.f32 %v717, %v718
      %v720 = vand.u32 %v719, 4294901760
      %721 = vmatmul.mubr.f32.gmra.mrb[0].mxu0 %v720
      %v722 = vpop.f32.mrb[0].mxu0
      %v723 = vadd.f32 %v401, %v722
      %v724 = vpop.f32.mrb[0].mxu0
      %725 = vmatprep.mubr.f32.mxu0 0.0
      %v726 = vand.u32 %v459, 4294901760
      %v727 = vsub.f32 %v459, %v726
      %v728 = vand.u32 %v727, 4294901760
      %v729 = vsub.f32 %v727, %v728
      %v730 = vand.u32 %v729, 4294901760
      %731 = vmatmul.mubr.f32.gmra.mrb[0].mxu0 %v730
      %v732 = vpop.f32.mrb[0].mxu0
      %v733 = vadd.f32 %v406, %v732
      %v734 = vpop.f32.mrb[0].mxu0
      %735 = vmatprep.mubr.f32.mxu0 0.0
      %v736 = vand.u32 %v462, 4294901760
      %v737 = vsub.f32 %v462, %v736
      %v738 = vand.u32 %v737, 4294901760
      %v739 = vsub.f32 %v737, %v738
      %v740 = vand.u32 %v739, 4294901760
      %741 = vmatmul.mubr.f32.gmra.mrb[0].mxu0 %v740
      %v742 = vpop.f32.mrb[0].mxu0
      %v743 = vadd.f32 %v411, %v742
      %v744 = vpop.f32.mrb[0].mxu0
      %745 = vmatprep.mubr.f32.mxu0 0.0
      %v746 = vand.u32 %v465, 4294901760
      %v747 = vsub.f32 %v465, %v746
      %v748 = vand.u32 %v747, 4294901760
      %v749 = vsub.f32 %v747, %v748
      %v750 = vand.u32 %v749, 4294901760
      %751 = vmatmul.mubr.f32.gmra.mrb[0].mxu0 %v750
      %v752 = vpop.f32.mrb[0].mxu0
      %v753 = vadd.f32 %v416, %v752
      %v754 = vpop.f32.mrb[0].mxu0
      %755 = vdwg.mxu0
      %756 = vmatprep.subr.mxu0 0.0
      %v757 = vand.u32 %v468, 4294901760
      %v758 = vsub.f32 %v468, %v757
      %v759 = vand.u32 %v758, 4294901760
      %v760 = vsub.f32 %v758, %v759
      %v761 = vand.u32 %v760, 4294901760
      %762 = vmatpush1.xpose.msra.mxu0 %v761
      %763 = vmatprep.subr.mxu0 0.0
      %v764 = vand.u32 %v471, 4294901760
      %v765 = vsub.f32 %v471, %v764
      %v766 = vand.u32 %v765, 4294901760
      %v767 = vsub.f32 %v765, %v766
      %v768 = vand.u32 %v767, 4294901760
      %769 = vmatpush1.xpose.msra.mxu0 %v768
      %770 = vmatprep.subr.mxu0 0.0
      %v771 = vand.u32 %v474, 4294901760
      %v772 = vsub.f32 %v474, %v771
      %v773 = vand.u32 %v772, 4294901760
      %v774 = vsub.f32 %v772, %v773
      %v775 = vand.u32 %v774, 4294901760
      %776 = vmatpush1.xpose.msra.mxu0 %v775
      %777 = vmatprep.subr.mxu0 0.0
      %v778 = vand.u32 %v477, 4294901760
      %v779 = vsub.f32 %v477, %v778
      %v780 = vand.u32 %v779, 4294901760
      %v781 = vsub.f32 %v779, %v780
      %v782 = vand.u32 %v781, 4294901760
      %783 = vmatpush1.xpose.msra.mxu0 %v782
      %784 = vmatprep.subr.mxu0 0.0
      %v785 = vand.u32 %v480, 4294901760
      %v786 = vsub.f32 %v480, %v785
      %v787 = vand.u32 %v786, 4294901760
      %v788 = vsub.f32 %v786, %v787
      %v789 = vand.u32 %v788, 4294901760
      %790 = vmatpush1.xpose.msra.mxu0 %v789
      %791 = vmatprep.subr.mxu0 0.0
      %v792 = vand.u32 %v483, 4294901760
      %v793 = vsub.f32 %v483, %v792
      %v794 = vand.u32 %v793, 4294901760
      %v795 = vsub.f32 %v793, %v794
      %v796 = vand.u32 %v795, 4294901760
      %797 = vmatpush1.xpose.msra.mxu0 %v796
      %798 = vmatprep.subr.mxu0 0.0
      %v799 = vand.u32 %v486, 4294901760
      %v800 = vsub.f32 %v486, %v799
      %v801 = vand.u32 %v800, 4294901760
      %v802 = vsub.f32 %v800, %v801
      %v803 = vand.u32 %v802, 4294901760
      %804 = vmatpush1.xpose.msra.mxu0 %v803
      %805 = vmatprep.subr.mxu0 0.0
      %v806 = vand.u32 %v489, 4294901760
      %v807 = vsub.f32 %v489, %v806
      %v808 = vand.u32 %v807, 4294901760
      %v809 = vsub.f32 %v807, %v808
      %v810 = vand.u32 %v809, 4294901760
      %811 = vmatpush1.xpose.msra.mxu0 %v810
      %812 = vmatprep.subr.mxu0 0.0
      %v813 = vand.u32 %v492, 4294901760
      %v814 = vsub.f32 %v492, %v813
      %v815 = vand.u32 %v814, 4294901760
      %v816 = vsub.f32 %v814, %v815
      %v817 = vand.u32 %v816, 4294901760
      %818 = vmatpush1.xpose.msra.mxu0 %v817
      %819 = vmatprep.subr.mxu0 0.0
      %v820 = vand.u32 %v495, 4294901760
      %v821 = vsub.f32 %v495, %v820
      %v822 = vand.u32 %v821, 4294901760
      %v823 = vsub.f32 %v821, %v822
      %v824 = vand.u32 %v823, 4294901760
      %825 = vmatpush1.xpose.msra.mxu0 %v824
      %826 = vmatprep.subr.mxu0 0.0
      %v827 = vand.u32 %v498, 4294901760
      %v828 = vsub.f32 %v498, %v827
      %v829 = vand.u32 %v828, 4294901760
      %v830 = vsub.f32 %v828, %v829
      %v831 = vand.u32 %v830, 4294901760
      %832 = vmatpush1.xpose.msra.mxu0 %v831
      %833 = vmatprep.subr.mxu0 0.0
      %v834 = vand.u32 %v501, 4294901760
      %v835 = vsub.f32 %v501, %v834
      %v836 = vand.u32 %v835, 4294901760
      %v837 = vsub.f32 %v835, %v836
      %v838 = vand.u32 %v837, 4294901760
      %839 = vmatpush1.xpose.msra.mxu0 %v838
      %840 = vmatprep.subr.mxu0 0.0
      %v841 = vand.u32 %v504, 4294901760
      %v842 = vsub.f32 %v504, %v841
      %v843 = vand.u32 %v842, 4294901760
      %v844 = vsub.f32 %v842, %v843
      %v845 = vand.u32 %v844, 4294901760
      %846 = vmatpush1.xpose.msra.mxu0 %v845
      %847 = vmatprep.subr.mxu0 0.0
      %v848 = vand.u32 %v507, 4294901760
      %v849 = vsub.f32 %v507, %v848
      %v850 = vand.u32 %v849, 4294901760
      %v851 = vsub.f32 %v849, %v850
      %v852 = vand.u32 %v851, 4294901760
      %853 = vmatpush1.xpose.msra.mxu0 %v852
      %854 = vmatprep.subr.mxu0 0.0
      %v855 = vand.u32 %v510, 4294901760
      %v856 = vsub.f32 %v510, %v855
      %v857 = vand.u32 %v856, 4294901760
      %v858 = vsub.f32 %v856, %v857
      %v859 = vand.u32 %v858, 4294901760
      %860 = vmatpush1.xpose.msra.mxu0 %v859
      %861 = vmatprep.subr.mxu0 0.0
      %v862 = vand.u32 %v513, 4294901760
      %v863 = vsub.f32 %v513, %v862
      %v864 = vand.u32 %v863, 4294901760
      %v865 = vsub.f32 %v863, %v864
      %v866 = vand.u32 %v865, 4294901760
      %867 = vmatpush1.xpose.msra.mxu0 %v866
      %868 = vmatprep.subr.mxu0 0.0
      %869 = vmatpush1.xpose.msra.mxu0 0.0
      %870 = vmatprep.subr.mxu0 0.0
      %871 = vmatpush1.xpose.msra.mxu0 0.0
      %872 = vmatprep.subr.mxu0 0.0
      %873 = vmatpush1.xpose.msra.mxu0 0.0
      %874 = vmatprep.subr.mxu0 0.0
      %875 = vmatpush1.xpose.msra.mxu0 0.0
      %876 = vmatprep.subr.mxu0 0.0
      %877 = vmatpush1.xpose.msra.mxu0 0.0
      %878 = vmatprep.subr.mxu0 0.0
      %879 = vmatpush1.xpose.msra.mxu0 0.0
      %880 = vmatprep.subr.mxu0 0.0
      %881 = vmatpush1.xpose.msra.mxu0 0.0
      %882 = vmatprep.subr.mxu0 0.0
      %883 = vmatpush1.xpose.msra.mxu0 0.0
      %884 = vmatprep.subr.mxu0 0.0
      %885 = vmatpush1.xpose.msra.mxu0 0.0
      %886 = vmatprep.subr.mxu0 0.0
      %887 = vmatpush1.xpose.msra.mxu0 0.0
      %888 = vmatprep.subr.mxu0 0.0
      %889 = vmatpush1.xpose.msra.mxu0 0.0
      %890 = vmatprep.subr.mxu0 0.0
      %891 = vmatpush1.xpose.msra.mxu0 0.0
      %892 = vmatprep.subr.mxu0 0.0
      %893 = vmatpush1.xpose.msra.mxu0 0.0
      %894 = vmatprep.subr.mxu0 0.0
      %895 = vmatpush1.xpose.msra.mxu0 0.0
      %896 = vmatprep.subr.mxu0 0.0
      %897 = vmatpush1.xpose.msra.mxu0 0.0
      %898 = vmatprep.subr.mxu0 0.0
      %899 = vmatpush1.xpose.msra.mxu0 0.0
      %900 = vmatprep.mubr.f32.mxu0 0.0
      %v901 = vand.u32 %v420, 4294901760
      %902 = vmatmul.mubr.f32.gmra.mrb[0].mxu0 %v901
      %v903 = vpop.f32.mrb[0].mxu0
      %v904 = vadd.f32 %v603, %v903
      %v905 = vpop.f32.mrb[0].mxu0
      %906 = vmatprep.mubr.f32.mxu0 0.0
      %v907 = vand.u32 %v423, 4294901760
      %908 = vmatmul.mubr.f32.gmra.mrb[0].mxu0 %v907
      %v909 = vpop.f32.mrb[0].mxu0
      %v910 = vadd.f32 %v613, %v909
      %v911 = vpop.f32.mrb[0].mxu0
      %912 = vmatprep.mubr.f32.mxu0 0.0
      %v913 = vand.u32 %v426, 4294901760
      %914 = vmatmul.mubr.f32.gmra.mrb[0].mxu0 %v913
      %v915 = vpop.f32.mrb[0].mxu0
      %v916 = vadd.f32 %v623, %v915
      %v917 = vpop.f32.mrb[0].mxu0
      %918 = vmatprep.mubr.f32.mxu0 0.0
      %v919 = vand.u32 %v429, 4294901760
      %920 = vmatmul.mubr.f32.gmra.mrb[0].mxu0 %v919
      %v921 = vpop.f32.mrb[0].mxu0
      %v922 = vadd.f32 %v633, %v921
      %v923 = vpop.f32.mrb[0].mxu0
      %924 = vmatprep.mubr.f32.mxu0 0.0
      %v925 = vand.u32 %v432, 4294901760
      %926 = vmatmul.mubr.f32.gmra.mrb[0].mxu0 %v925
      %v927 = vpop.f32.mrb[0].mxu0
      %v928 = vadd.f32 %v643, %v927
      %v929 = vpop.f32.mrb[0].mxu0
      %930 = vmatprep.mubr.f32.mxu0 0.0
      %v931 = vand.u32 %v435, 4294901760
      %932 = vmatmul.mubr.f32.gmra.mrb[0].mxu0 %v931
      %v933 = vpop.f32.mrb[0].mxu0
      %v934 = vadd.f32 %v653, %v933
      %v935 = vpop.f32.mrb[0].mxu0
      %936 = vmatprep.mubr.f32.mxu0 0.0
      %v937 = vand.u32 %v438, 4294901760
      %938 = vmatmul.mubr.f32.gmra.mrb[0].mxu0 %v937
      %v939 = vpop.f32.mrb[0].mxu0
      %v940 = vadd.f32 %v663, %v939
      %v941 = vpop.f32.mrb[0].mxu0
      %942 = vmatprep.mubr.f32.mxu0 0.0
      %v943 = vand.u32 %v441, 4294901760
      %944 = vmatmul.mubr.f32.gmra.mrb[0].mxu0 %v943
      %v945 = vpop.f32.mrb[0].mxu0
      %v946 = vadd.f32 %v673, %v945
      %v947 = vpop.f32.mrb[0].mxu0
      %948 = vmatprep.mubr.f32.mxu0 0.0
      %v949 = vand.u32 %v444, 4294901760
      %950 = vmatmul.mubr.f32.gmra.mrb[0].mxu0 %v949
      %v951 = vpop.f32.mrb[0].mxu0
      %v952 = vadd.f32 %v683, %v951
      %v953 = vpop.f32.mrb[0].mxu0
      %954 = vmatprep.mubr.f32.mxu0 0.0
      %v955 = vand.u32 %v447, 4294901760
      %956 = vmatmul.mubr.f32.gmra.mrb[0].mxu0 %v955
      %v957 = vpop.f32.mrb[0].mxu0
      %v958 = vadd.f32 %v693, %v957
      %v959 = vpop.f32.mrb[0].mxu0
      %960 = vmatprep.mubr.f32.mxu0 0.0
      %v961 = vand.u32 %v450, 4294901760
      %962 = vmatmul.mubr.f32.gmra.mrb[0].mxu0 %v961
      %v963 = vpop.f32.mrb[0].mxu0
      %v964 = vadd.f32 %v703, %v963
      %v965 = vpop.f32.mrb[0].mxu0
      %966 = vmatprep.mubr.f32.mxu0 0.0
      %v967 = vand.u32 %v453, 4294901760
      %968 = vmatmul.mubr.f32.gmra.mrb[0].mxu0 %v967
      %v969 = vpop.f32.mrb[0].mxu0
      %v970 = vadd.f32 %v713, %v969
      %v971 = vpop.f32.mrb[0].mxu0
      %972 = vmatprep.mubr.f32.mxu0 0.0
      %v973 = vand.u32 %v456, 4294901760
      %974 = vmatmul.mubr.f32.gmra.mrb[0].mxu0 %v973
      %v975 = vpop.f32.mrb[0].mxu0
      %v976 = vadd.f32 %v723, %v975
      %v977 = vpop.f32.mrb[0].mxu0
      %978 = vmatprep.mubr.f32.mxu0 0.0
      %v979 = vand.u32 %v459, 4294901760
      %980 = vmatmul.mubr.f32.gmra.mrb[0].mxu0 %v979
      %v981 = vpop.f32.mrb[0].mxu0
      %v982 = vadd.f32 %v733, %v981
      %v983 = vpop.f32.mrb[0].mxu0
      %984 = vmatprep.mubr.f32.mxu0 0.0
      %v985 = vand.u32 %v462, 4294901760
      %986 = vmatmul.mubr.f32.gmra.mrb[0].mxu0 %v985
      %v987 = vpop.f32.mrb[0].mxu0
      %v988 = vadd.f32 %v743, %v987
      %v989 = vpop.f32.mrb[0].mxu0
      %990 = vmatprep.mubr.f32.mxu0 0.0
      %v991 = vand.u32 %v465, 4294901760
      %992 = vmatmul.mubr.f32.gmra.mrb[0].mxu0 %v991
      %v993 = vpop.f32.mrb[0].mxu0
      %v994 = vadd.f32 %v753, %v993
      %v995 = vpop.f32.mrb[0].mxu0
      %996 = vdwg.mxu0
      %997 = vmatprep.subr.mxu0 0.0
      %v998 = vand.u32 %v468, 4294901760
      %v999 = vsub.f32 %v468, %v998
      %1000 = vmatpush1.xpose.msra.mxu0 %v999
      %1001 = vmatprep.subr.mxu0 0.0
      %v1002 = vand.u32 %v471, 4294901760
      %v1003 = vsub.f32 %v471, %v1002
      %1004 = vmatpush1.xpose.msra.mxu0 %v1003
      %1005 = vmatprep.subr.mxu0 0.0
      %v1006 = vand.u32 %v474, 4294901760
      %v1007 = vsub.f32 %v474, %v1006
      %1008 = vmatpush1.xpose.msra.mxu0 %v1007
      %1009 = vmatprep.subr.mxu0 0.0
      %v1010 = vand.u32 %v477, 4294901760
      %v1011 = vsub.f32 %v477, %v1010
      %1012 = vmatpush1.xpose.msra.mxu0 %v1011
      %1013 = vmatprep.subr.mxu0 0.0
      %v1014 = vand.u32 %v480, 4294901760
      %v1015 = vsub.f32 %v480, %v1014
      %1016 = vmatpush1.xpose.msra.mxu0 %v1015
      %1017 = vmatprep.subr.mxu0 0.0
      %v1018 = vand.u32 %v483, 4294901760
      %v1019 = vsub.f32 %v483, %v1018
      %1020 = vmatpush1.xpose.msra.mxu0 %v1019
      %1021 = vmatprep.subr.mxu0 0.0
      %v1022 = vand.u32 %v486, 4294901760
      %v1023 = vsub.f32 %v486, %v1022
      %1024 = vmatpush1.xpose.msra.mxu0 %v1023
      %1025 = vmatprep.subr.mxu0 0.0
      %v1026 = vand.u32 %v489, 4294901760
      %v1027 = vsub.f32 %v489, %v1026
      %1028 = vmatpush1.xpose.msra.mxu0 %v1027
      %1029 = vmatprep.subr.mxu0 0.0
      %v1030 = vand.u32 %v492, 4294901760
      %v1031 = vsub.f32 %v492, %v1030
      %1032 = vmatpush1.xpose.msra.mxu0 %v1031
      %1033 = vmatprep.subr.mxu0 0.0
      %v1034 = vand.u32 %v495, 4294901760
      %v1035 = vsub.f32 %v495, %v1034
      %1036 = vmatpush1.xpose.msra.mxu0 %v1035
      %1037 = vmatprep.subr.mxu0 0.0
      %v1038 = vand.u32 %v498, 4294901760
      %v1039 = vsub.f32 %v498, %v1038
      %1040 = vmatpush1.xpose.msra.mxu0 %v1039
      %1041 = vmatprep.subr.mxu0 0.0
      %v1042 = vand.u32 %v501, 4294901760
      %v1043 = vsub.f32 %v501, %v1042
      %1044 = vmatpush1.xpose.msra.mxu0 %v1043
      %1045 = vmatprep.subr.mxu0 0.0
      %v1046 = vand.u32 %v504, 4294901760
      %v1047 = vsub.f32 %v504, %v1046
      %1048 = vmatpush1.xpose.msra.mxu0 %v1047
      %1049 = vmatprep.subr.mxu0 0.0
      %v1050 = vand.u32 %v507, 4294901760
      %v1051 = vsub.f32 %v507, %v1050
      %1052 = vmatpush1.xpose.msra.mxu0 %v1051
      %1053 = vmatprep.subr.mxu0 0.0
      %v1054 = vand.u32 %v510, 4294901760
      %v1055 = vsub.f32 %v510, %v1054
      %1056 = vmatpush1.xpose.msra.mxu0 %v1055
      %1057 = vmatprep.subr.mxu0 0.0
      %v1058 = vand.u32 %v513, 4294901760
      %v1059 = vsub.f32 %v513, %v1058
      %1060 = vmatpush1.xpose.msra.mxu0 %v1059
      %1061 = vmatprep.subr.mxu0 0.0
      %1062 = vmatpush1.xpose.msra.mxu0 0.0
      %1063 = vmatprep.subr.mxu0 0.0
      %1064 = vmatpush1.xpose.msra.mxu0 0.0
      %1065 = vmatprep.subr.mxu0 0.0
      %1066 = vmatpush1.xpose.msra.mxu0 0.0
      %1067 = vmatprep.subr.mxu0 0.0
      %1068 = vmatpush1.xpose.msra.mxu0 0.0
      %1069 = vmatprep.subr.mxu0 0.0
      %1070 = vmatpush1.xpose.msra.mxu0 0.0
      %1071 = vmatprep.subr.mxu0 0.0
      %1072 = vmatpush1.xpose.msra.mxu0 0.0
      %1073 = vmatprep.subr.mxu0 0.0
      %1074 = vmatpush1.xpose.msra.mxu0 0.0
      %1075 = vmatprep.subr.mxu0 0.0
      %1076 = vmatpush1.xpose.msra.mxu0 0.0
      %1077 = vmatprep.subr.mxu0 0.0
      %1078 = vmatpush1.xpose.msra.mxu0 0.0
      %1079 = vmatprep.subr.mxu0 0.0
      %1080 = vmatpush1.xpose.msra.mxu0 0.0
      %1081 = vmatprep.subr.mxu0 0.0
      %1082 = vmatpush1.xpose.msra.mxu0 0.0
      %1083 = vmatprep.subr.mxu0 0.0
      %1084 = vmatpush1.xpose.msra.mxu0 0.0
      %1085 = vmatprep.subr.mxu0 0.0
      %1086 = vmatpush1.xpose.msra.mxu0 0.0
      %1087 = vmatprep.subr.mxu0 0.0
      %1088 = vmatpush1.xpose.msra.mxu0 0.0
      %1089 = vmatprep.subr.mxu0 0.0
      %1090 = vmatpush1.xpose.msra.mxu0 0.0
      %1091 = vmatprep.subr.mxu0 0.0
      %1092 = vmatpush1.xpose.msra.mxu0 0.0
      %1093 = vmatprep.mubr.f32.mxu0 0.0
      %v1094 = vand.u32 %v420, 4294901760
      %v1095 = vsub.f32 %v420, %v1094
      %1096 = vmatmul.mubr.f32.gmra.mrb[0].mxu0 %v1095
      %v1097 = vpop.f32.mrb[0].mxu0
      %v1098 = vadd.f32 %v904, %v1097
      %v1099 = vpop.f32.mrb[0].mxu0
      %1100 = vmatprep.mubr.f32.mxu0 0.0
      %v1101 = vand.u32 %v423, 4294901760
      %v1102 = vsub.f32 %v423, %v1101
      %1103 = vmatmul.mubr.f32.gmra.mrb[0].mxu0 %v1102
      %v1104 = vpop.f32.mrb[0].mxu0
      %v1105 = vadd.f32 %v910, %v1104
      %v1106 = vpop.f32.mrb[0].mxu0
      %1107 = vmatprep.mubr.f32.mxu0 0.0
      %v1108 = vand.u32 %v426, 4294901760
      %v1109 = vsub.f32 %v426, %v1108
      %1110 = vmatmul.mubr.f32.gmra.mrb[0].mxu0 %v1109
      %v1111 = vpop.f32.mrb[0].mxu0
      %v1112 = vadd.f32 %v916, %v1111
      %v1113 = vpop.f32.mrb[0].mxu0
      %1114 = vmatprep.mubr.f32.mxu0 0.0
      %v1115 = vand.u32 %v429, 4294901760
      %v1116 = vsub.f32 %v429, %v1115
      %1117 = vmatmul.mubr.f32.gmra.mrb[0].mxu0 %v1116
      %v1118 = vpop.f32.mrb[0].mxu0
      %v1119 = vadd.f32 %v922, %v1118
      %v1120 = vpop.f32.mrb[0].mxu0
      %1121 = vmatprep.mubr.f32.mxu0 0.0
      %v1122 = vand.u32 %v432, 4294901760
      %v1123 = vsub.f32 %v432, %v1122
      %1124 = vmatmul.mubr.f32.gmra.mrb[0].mxu0 %v1123
      %v1125 = vpop.f32.mrb[0].mxu0
      %v1126 = vadd.f32 %v928, %v1125
      %v1127 = vpop.f32.mrb[0].mxu0
      %1128 = vmatprep.mubr.f32.mxu0 0.0
      %v1129 = vand.u32 %v435, 4294901760
      %v1130 = vsub.f32 %v435, %v1129
      %1131 = vmatmul.mubr.f32.gmra.mrb[0].mxu0 %v1130
      %v1132 = vpop.f32.mrb[0].mxu0
      %v1133 = vadd.f32 %v934, %v1132
      %v1134 = vpop.f32.mrb[0].mxu0
      %1135 = vmatprep.mubr.f32.mxu0 0.0
      %v1136 = vand.u32 %v438, 4294901760
      %v1137 = vsub.f32 %v438, %v1136
      %1138 = vmatmul.mubr.f32.gmra.mrb[0].mxu0 %v1137
      %v1139 = vpop.f32.mrb[0].mxu0
      %v1140 = vadd.f32 %v940, %v1139
      %v1141 = vpop.f32.mrb[0].mxu0
      %1142 = vmatprep.mubr.f32.mxu0 0.0
      %v1143 = vand.u32 %v441, 4294901760
      %v1144 = vsub.f32 %v441, %v1143
      %1145 = vmatmul.mubr.f32.gmra.mrb[0].mxu0 %v1144
      %v1146 = vpop.f32.mrb[0].mxu0
      %v1147 = vadd.f32 %v946, %v1146
      %v1148 = vpop.f32.mrb[0].mxu0
      %1149 = vmatprep.mubr.f32.mxu0 0.0
      %v1150 = vand.u32 %v444, 4294901760
      %v1151 = vsub.f32 %v444, %v1150
      %1152 = vmatmul.mubr.f32.gmra.mrb[0].mxu0 %v1151
      %v1153 = vpop.f32.mrb[0].mxu0
      %v1154 = vadd.f32 %v952, %v1153
      %v1155 = vpop.f32.mrb[0].mxu0
      %1156 = vmatprep.mubr.f32.mxu0 0.0
      %v1157 = vand.u32 %v447, 4294901760
      %v1158 = vsub.f32 %v447, %v1157
      %1159 = vmatmul.mubr.f32.gmra.mrb[0].mxu0 %v1158
      %v1160 = vpop.f32.mrb[0].mxu0
      %v1161 = vadd.f32 %v958, %v1160
      %v1162 = vpop.f32.mrb[0].mxu0
      %1163 = vmatprep.mubr.f32.mxu0 0.0
      %v1164 = vand.u32 %v450, 4294901760
      %v1165 = vsub.f32 %v450, %v1164
      %1166 = vmatmul.mubr.f32.gmra.mrb[0].mxu0 %v1165
      %v1167 = vpop.f32.mrb[0].mxu0
      %v1168 = vadd.f32 %v964, %v1167
      %v1169 = vpop.f32.mrb[0].mxu0
      %1170 = vmatprep.mubr.f32.mxu0 0.0
      %v1171 = vand.u32 %v453, 4294901760
      %v1172 = vsub.f32 %v453, %v1171
      %1173 = vmatmul.mubr.f32.gmra.mrb[0].mxu0 %v1172
      %v1174 = vpop.f32.mrb[0].mxu0
      %v1175 = vadd.f32 %v970, %v1174
      %v1176 = vpop.f32.mrb[0].mxu0
      %1177 = vmatprep.mubr.f32.mxu0 0.0
      %v1178 = vand.u32 %v456, 4294901760
      %v1179 = vsub.f32 %v456, %v1178
      %1180 = vmatmul.mubr.f32.gmra.mrb[0].mxu0 %v1179
      %v1181 = vpop.f32.mrb[0].mxu0
      %v1182 = vadd.f32 %v976, %v1181
      %v1183 = vpop.f32.mrb[0].mxu0
      %1184 = vmatprep.mubr.f32.mxu0 0.0
      %v1185 = vand.u32 %v459, 4294901760
      %v1186 = vsub.f32 %v459, %v1185
      %1187 = vmatmul.mubr.f32.gmra.mrb[0].mxu0 %v1186
      %v1188 = vpop.f32.mrb[0].mxu0
      %v1189 = vadd.f32 %v982, %v1188
      %v1190 = vpop.f32.mrb[0].mxu0
      %1191 = vmatprep.mubr.f32.mxu0 0.0
      %v1192 = vand.u32 %v462, 4294901760
      %v1193 = vsub.f32 %v462, %v1192
      %1194 = vmatmul.mubr.f32.gmra.mrb[0].mxu0 %v1193
      %v1195 = vpop.f32.mrb[0].mxu0
      %v1196 = vadd.f32 %v988, %v1195
      %v1197 = vpop.f32.mrb[0].mxu0
      %1198 = vmatprep.mubr.f32.mxu0 0.0
      %v1199 = vand.u32 %v465, 4294901760
      %v1200 = vsub.f32 %v465, %v1199
      %1201 = vmatmul.mubr.f32.gmra.mrb[0].mxu0 %v1200
      %v1202 = vpop.f32.mrb[0].mxu0
      %v1203 = vadd.f32 %v994, %v1202
      %v1204 = vpop.f32.mrb[0].mxu0
      %1205 = vdwg.mxu0
      %1206 = vmatprep.subr.mxu0 0.0
      %v1207 = vand.u32 %v468, 4294901760
      %1208 = vmatpush1.xpose.msra.mxu0 %v1207
      %1209 = vmatprep.subr.mxu0 0.0
      %v1210 = vand.u32 %v471, 4294901760
      %1211 = vmatpush1.xpose.msra.mxu0 %v1210
      %1212 = vmatprep.subr.mxu0 0.0
      %v1213 = vand.u32 %v474, 4294901760
      %1214 = vmatpush1.xpose.msra.mxu0 %v1213
      %1215 = vmatprep.subr.mxu0 0.0
      %v1216 = vand.u32 %v477, 4294901760
      %1217 = vmatpush1.xpose.msra.mxu0 %v1216
      %1218 = vmatprep.subr.mxu0 0.0
      %v1219 = vand.u32 %v480, 4294901760
      %1220 = vmatpush1.xpose.msra.mxu0 %v1219
      %1221 = vmatprep.subr.mxu0 0.0
      %v1222 = vand.u32 %v483, 4294901760
      %1223 = vmatpush1.xpose.msra.mxu0 %v1222
      %1224 = vmatprep.subr.mxu0 0.0
      %v1225 = vand.u32 %v486, 4294901760
      %1226 = vmatpush1.xpose.msra.mxu0 %v1225
      %1227 = vmatprep.subr.mxu0 0.0
      %v1228 = vand.u32 %v489, 4294901760
      %1229 = vmatpush1.xpose.msra.mxu0 %v1228
      %1230 = vmatprep.subr.mxu0 0.0
      %v1231 = vand.u32 %v492, 4294901760
      %1232 = vmatpush1.xpose.msra.mxu0 %v1231
      %1233 = vmatprep.subr.mxu0 0.0
      %v1234 = vand.u32 %v495, 4294901760
      %1235 = vmatpush1.xpose.msra.mxu0 %v1234
      %1236 = vmatprep.subr.mxu0 0.0
      %v1237 = vand.u32 %v498, 4294901760
      %1238 = vmatpush1.xpose.msra.mxu0 %v1237
      %1239 = vmatprep.subr.mxu0 0.0
      %v1240 = vand.u32 %v501, 4294901760
      %1241 = vmatpush1.xpose.msra.mxu0 %v1240
      %1242 = vmatprep.subr.mxu0 0.0
      %v1243 = vand.u32 %v504, 4294901760
      %1244 = vmatpush1.xpose.msra.mxu0 %v1243
      %1245 = vmatprep.subr.mxu0 0.0
      %v1246 = vand.u32 %v507, 4294901760
      %1247 = vmatpush1.xpose.msra.mxu0 %v1246
      %1248 = vmatprep.subr.mxu0 0.0
      %v1249 = vand.u32 %v510, 4294901760
      %1250 = vmatpush1.xpose.msra.mxu0 %v1249
      %1251 = vmatprep.subr.mxu0 0.0
      %v1252 = vand.u32 %v513, 4294901760
      %1253 = vmatpush1.xpose.msra.mxu0 %v1252
      %1254 = vmatprep.subr.mxu0 0.0
      %1255 = vmatpush1.xpose.msra.mxu0 0.0
      %1256 = vmatprep.subr.mxu0 0.0
      %1257 = vmatpush1.xpose.msra.mxu0 0.0
      %1258 = vmatprep.subr.mxu0 0.0
      %1259 = vmatpush1.xpose.msra.mxu0 0.0
      %1260 = vmatprep.subr.mxu0 0.0
      %1261 = vmatpush1.xpose.msra.mxu0 0.0
      %1262 = vmatprep.subr.mxu0 0.0
      %1263 = vmatpush1.xpose.msra.mxu0 0.0
      %1264 = vmatprep.subr.mxu0 0.0
      %1265 = vmatpush1.xpose.msra.mxu0 0.0
      %1266 = vmatprep.subr.mxu0 0.0
      %1267 = vmatpush1.xpose.msra.mxu0 0.0
      %1268 = vmatprep.subr.mxu0 0.0
      %1269 = vmatpush1.xpose.msra.mxu0 0.0
      %1270 = vmatprep.subr.mxu0 0.0
      %1271 = vmatpush1.xpose.msra.mxu0 0.0
      %1272 = vmatprep.subr.mxu0 0.0
      %1273 = vmatpush1.xpose.msra.mxu0 0.0
      %1274 = vmatprep.subr.mxu0 0.0
      %1275 = vmatpush1.xpose.msra.mxu0 0.0
      %1276 = vmatprep.subr.mxu0 0.0
      %1277 = vmatpush1.xpose.msra.mxu0 0.0
      %1278 = vmatprep.subr.mxu0 0.0
      %1279 = vmatpush1.xpose.msra.mxu0 0.0
      %1280 = vmatprep.subr.mxu0 0.0
      %1281 = vmatpush1.xpose.msra.mxu0 0.0
      %1282 = vmatprep.subr.mxu0 0.0
      %1283 = vmatpush1.xpose.msra.mxu0 0.0
      %1284 = vmatprep.subr.mxu0 0.0
      %1285 = vmatpush1.xpose.msra.mxu0 0.0
      %1286 = vmatprep.mubr.f32.mxu0 0.0
      %v1287 = vand.u32 %v420, 4294901760
      %v1288 = vsub.f32 %v420, %v1287
      %v1289 = vand.u32 %v1288, 4294901760
      %1290 = vmatmul.mubr.f32.gmra.mrb[0].mxu0 %v1289
      %v1291 = vpop.f32.mrb[0].mxu0
      %v1292 = vadd.f32 %v1098, %v1291
      %v1293 = vpop.f32.mrb[0].mxu0
      %1294 = vmatprep.mubr.f32.mxu0 0.0
      %v1295 = vand.u32 %v423, 4294901760
      %v1296 = vsub.f32 %v423, %v1295
      %v1297 = vand.u32 %v1296, 4294901760
      %1298 = vmatmul.mubr.f32.gmra.mrb[0].mxu0 %v1297
      %v1299 = vpop.f32.mrb[0].mxu0
      %v1300 = vadd.f32 %v1105, %v1299
      %v1301 = vpop.f32.mrb[0].mxu0
      %1302 = vmatprep.mubr.f32.mxu0 0.0
      %v1303 = vand.u32 %v426, 4294901760
      %v1304 = vsub.f32 %v426, %v1303
      %v1305 = vand.u32 %v1304, 4294901760
      %1306 = vmatmul.mubr.f32.gmra.mrb[0].mxu0 %v1305
      %v1307 = vpop.f32.mrb[0].mxu0
      %v1308 = vadd.f32 %v1112, %v1307
      %v1309 = vpop.f32.mrb[0].mxu0
      %1310 = vmatprep.mubr.f32.mxu0 0.0
      %v1311 = vand.u32 %v429, 4294901760
      %v1312 = vsub.f32 %v429, %v1311
      %v1313 = vand.u32 %v1312, 4294901760
      %1314 = vmatmul.mubr.f32.gmra.mrb[0].mxu0 %v1313
      %v1315 = vpop.f32.mrb[0].mxu0
      %v1316 = vadd.f32 %v1119, %v1315
      %v1317 = vpop.f32.mrb[0].mxu0
      %1318 = vmatprep.mubr.f32.mxu0 0.0
      %v1319 = vand.u32 %v432, 4294901760
      %v1320 = vsub.f32 %v432, %v1319
      %v1321 = vand.u32 %v1320, 4294901760
      %1322 = vmatmul.mubr.f32.gmra.mrb[0].mxu0 %v1321
      %v1323 = vpop.f32.mrb[0].mxu0
      %v1324 = vadd.f32 %v1126, %v1323
      %v1325 = vpop.f32.mrb[0].mxu0
      %1326 = vmatprep.mubr.f32.mxu0 0.0
      %v1327 = vand.u32 %v435, 4294901760
      %v1328 = vsub.f32 %v435, %v1327
      %v1329 = vand.u32 %v1328, 4294901760
      %1330 = vmatmul.mubr.f32.gmra.mrb[0].mxu0 %v1329
      %v1331 = vpop.f32.mrb[0].mxu0
      %v1332 = vadd.f32 %v1133, %v1331
      %v1333 = vpop.f32.mrb[0].mxu0
      %1334 = vmatprep.mubr.f32.mxu0 0.0
      %v1335 = vand.u32 %v438, 4294901760
      %v1336 = vsub.f32 %v438, %v1335
      %v1337 = vand.u32 %v1336, 4294901760
      %1338 = vmatmul.mubr.f32.gmra.mrb[0].mxu0 %v1337
      %v1339 = vpop.f32.mrb[0].mxu0
      %v1340 = vadd.f32 %v1140, %v1339
      %v1341 = vpop.f32.mrb[0].mxu0
      %1342 = vmatprep.mubr.f32.mxu0 0.0
      %v1343 = vand.u32 %v441, 4294901760
      %v1344 = vsub.f32 %v441, %v1343
      %v1345 = vand.u32 %v1344, 4294901760
      %1346 = vmatmul.mubr.f32.gmra.mrb[0].mxu0 %v1345
      %v1347 = vpop.f32.mrb[0].mxu0
      %v1348 = vadd.f32 %v1147, %v1347
      %v1349 = vpop.f32.mrb[0].mxu0
      %1350 = vmatprep.mubr.f32.mxu0 0.0
      %v1351 = vand.u32 %v444, 4294901760
      %v1352 = vsub.f32 %v444, %v1351
      %v1353 = vand.u32 %v1352, 4294901760
      %1354 = vmatmul.mubr.f32.gmra.mrb[0].mxu0 %v1353
      %v1355 = vpop.f32.mrb[0].mxu0
      %v1356 = vadd.f32 %v1154, %v1355
      %v1357 = vpop.f32.mrb[0].mxu0
      %1358 = vmatprep.mubr.f32.mxu0 0.0
      %v1359 = vand.u32 %v447, 4294901760
      %v1360 = vsub.f32 %v447, %v1359
      %v1361 = vand.u32 %v1360, 4294901760
      %1362 = vmatmul.mubr.f32.gmra.mrb[0].mxu0 %v1361
      %v1363 = vpop.f32.mrb[0].mxu0
      %v1364 = vadd.f32 %v1161, %v1363
      %v1365 = vpop.f32.mrb[0].mxu0
      %1366 = vmatprep.mubr.f32.mxu0 0.0
      %v1367 = vand.u32 %v450, 4294901760
      %v1368 = vsub.f32 %v450, %v1367
      %v1369 = vand.u32 %v1368, 4294901760
      %1370 = vmatmul.mubr.f32.gmra.mrb[0].mxu0 %v1369
      %v1371 = vpop.f32.mrb[0].mxu0
      %v1372 = vadd.f32 %v1168, %v1371
      %v1373 = vpop.f32.mrb[0].mxu0
      %1374 = vmatprep.mubr.f32.mxu0 0.0
      %v1375 = vand.u32 %v453, 4294901760
      %v1376 = vsub.f32 %v453, %v1375
      %v1377 = vand.u32 %v1376, 4294901760
      %1378 = vmatmul.mubr.f32.gmra.mrb[0].mxu0 %v1377
      %v1379 = vpop.f32.mrb[0].mxu0
      %v1380 = vadd.f32 %v1175, %v1379
      %v1381 = vpop.f32.mrb[0].mxu0
      %1382 = vmatprep.mubr.f32.mxu0 0.0
      %v1383 = vand.u32 %v456, 4294901760
      %v1384 = vsub.f32 %v456, %v1383
      %v1385 = vand.u32 %v1384, 4294901760
      %1386 = vmatmul.mubr.f32.gmra.mrb[0].mxu0 %v1385
      %v1387 = vpop.f32.mrb[0].mxu0
      %v1388 = vadd.f32 %v1182, %v1387
      %v1389 = vpop.f32.mrb[0].mxu0
      %1390 = vmatprep.mubr.f32.mxu0 0.0
      %v1391 = vand.u32 %v459, 4294901760
      %v1392 = vsub.f32 %v459, %v1391
      %v1393 = vand.u32 %v1392, 4294901760
      %1394 = vmatmul.mubr.f32.gmra.mrb[0].mxu0 %v1393
      %v1395 = vpop.f32.mrb[0].mxu0
      %v1396 = vadd.f32 %v1189, %v1395
      %v1397 = vpop.f32.mrb[0].mxu0
      %1398 = vmatprep.mubr.f32.mxu0 0.0
      %v1399 = vand.u32 %v462, 4294901760
      %v1400 = vsub.f32 %v462, %v1399
      %v1401 = vand.u32 %v1400, 4294901760
      %1402 = vmatmul.mubr.f32.gmra.mrb[0].mxu0 %v1401
      %v1403 = vpop.f32.mrb[0].mxu0
      %v1404 = vadd.f32 %v1196, %v1403
      %v1405 = vpop.f32.mrb[0].mxu0
      %1406 = vmatprep.mubr.f32.mxu0 0.0
      %v1407 = vand.u32 %v465, 4294901760
      %v1408 = vsub.f32 %v465, %v1407
      %v1409 = vand.u32 %v1408, 4294901760
      %1410 = vmatmul.mubr.f32.gmra.mrb[0].mxu0 %v1409
      %v1411 = vpop.f32.mrb[0].mxu0
      %v1412 = vadd.f32 %v1203, %v1411
      %v1413 = vpop.f32.mrb[0].mxu0
      %1414 = vdwg.mxu0
      %1415 = vmatprep.subr.mxu0 0.0
      %v1416 = vand.u32 %v468, 4294901760
      %v1417 = vsub.f32 %v468, %v1416
      %v1418 = vand.u32 %v1417, 4294901760
      %1419 = vmatpush1.xpose.msra.mxu0 %v1418
      %1420 = vmatprep.subr.mxu0 0.0
      %v1421 = vand.u32 %v471, 4294901760
      %v1422 = vsub.f32 %v471, %v1421
      %v1423 = vand.u32 %v1422, 4294901760
      %1424 = vmatpush1.xpose.msra.mxu0 %v1423
      %1425 = vmatprep.subr.mxu0 0.0
      %v1426 = vand.u32 %v474, 4294901760
      %v1427 = vsub.f32 %v474, %v1426
      %v1428 = vand.u32 %v1427, 4294901760
      %1429 = vmatpush1.xpose.msra.mxu0 %v1428
      %1430 = vmatprep.subr.mxu0 0.0
      %v1431 = vand.u32 %v477, 4294901760
      %v1432 = vsub.f32 %v477, %v1431
      %v1433 = vand.u32 %v1432, 4294901760
      %1434 = vmatpush1.xpose.msra.mxu0 %v1433
      %1435 = vmatprep.subr.mxu0 0.0
      %v1436 = vand.u32 %v480, 4294901760
      %v1437 = vsub.f32 %v480, %v1436
      %v1438 = vand.u32 %v1437, 4294901760
      %1439 = vmatpush1.xpose.msra.mxu0 %v1438
      %1440 = vmatprep.subr.mxu0 0.0
      %v1441 = vand.u32 %v483, 4294901760
      %v1442 = vsub.f32 %v483, %v1441
      %v1443 = vand.u32 %v1442, 4294901760
      %1444 = vmatpush1.xpose.msra.mxu0 %v1443
      %1445 = vmatprep.subr.mxu0 0.0
      %v1446 = vand.u32 %v486, 4294901760
      %v1447 = vsub.f32 %v486, %v1446
      %v1448 = vand.u32 %v1447, 4294901760
      %1449 = vmatpush1.xpose.msra.mxu0 %v1448
      %1450 = vmatprep.subr.mxu0 0.0
      %v1451 = vand.u32 %v489, 4294901760
      %v1452 = vsub.f32 %v489, %v1451
      %v1453 = vand.u32 %v1452, 4294901760
      %1454 = vmatpush1.xpose.msra.mxu0 %v1453
      %1455 = vmatprep.subr.mxu0 0.0
      %v1456 = vand.u32 %v492, 4294901760
      %v1457 = vsub.f32 %v492, %v1456
      %v1458 = vand.u32 %v1457, 4294901760
      %1459 = vmatpush1.xpose.msra.mxu0 %v1458
      %1460 = vmatprep.subr.mxu0 0.0
      %v1461 = vand.u32 %v495, 4294901760
      %v1462 = vsub.f32 %v495, %v1461
      %v1463 = vand.u32 %v1462, 4294901760
      %1464 = vmatpush1.xpose.msra.mxu0 %v1463
      %1465 = vmatprep.subr.mxu0 0.0
      %v1466 = vand.u32 %v498, 4294901760
      %v1467 = vsub.f32 %v498, %v1466
      %v1468 = vand.u32 %v1467, 4294901760
      %1469 = vmatpush1.xpose.msra.mxu0 %v1468
      %1470 = vmatprep.subr.mxu0 0.0
      %v1471 = vand.u32 %v501, 4294901760
      %v1472 = vsub.f32 %v501, %v1471
      %v1473 = vand.u32 %v1472, 4294901760
      %1474 = vmatpush1.xpose.msra.mxu0 %v1473
      %1475 = vmatprep.subr.mxu0 0.0
      %v1476 = vand.u32 %v504, 4294901760
      %v1477 = vsub.f32 %v504, %v1476
      %v1478 = vand.u32 %v1477, 4294901760
      %1479 = vmatpush1.xpose.msra.mxu0 %v1478
      %1480 = vmatprep.subr.mxu0 0.0
      %v1481 = vand.u32 %v507, 4294901760
      %v1482 = vsub.f32 %v507, %v1481
      %v1483 = vand.u32 %v1482, 4294901760
      %1484 = vmatpush1.xpose.msra.mxu0 %v1483
      %1485 = vmatprep.subr.mxu0 0.0
      %v1486 = vand.u32 %v510, 4294901760
      %v1487 = vsub.f32 %v510, %v1486
      %v1488 = vand.u32 %v1487, 4294901760
      %1489 = vmatpush1.xpose.msra.mxu0 %v1488
      %1490 = vmatprep.subr.mxu0 0.0
      %v1491 = vand.u32 %v513, 4294901760
      %v1492 = vsub.f32 %v513, %v1491
      %v1493 = vand.u32 %v1492, 4294901760
      %1494 = vmatpush1.xpose.msra.mxu0 %v1493
      %1495 = vmatprep.subr.mxu0 0.0
      %1496 = vmatpush1.xpose.msra.mxu0 0.0
      %1497 = vmatprep.subr.mxu0 0.0
      %1498 = vmatpush1.xpose.msra.mxu0 0.0
      %1499 = vmatprep.subr.mxu0 0.0
      %1500 = vmatpush1.xpose.msra.mxu0 0.0
      %1501 = vmatprep.subr.mxu0 0.0
      %1502 = vmatpush1.xpose.msra.mxu0 0.0
      %1503 = vmatprep.subr.mxu0 0.0
      %1504 = vmatpush1.xpose.msra.mxu0 0.0
      %1505 = vmatprep.subr.mxu0 0.0
      %1506 = vmatpush1.xpose.msra.mxu0 0.0
      %1507 = vmatprep.subr.mxu0 0.0
      %1508 = vmatpush1.xpose.msra.mxu0 0.0
      %1509 = vmatprep.subr.mxu0 0.0
      %1510 = vmatpush1.xpose.msra.mxu0 0.0
      %1511 = vmatprep.subr.mxu0 0.0
      %1512 = vmatpush1.xpose.msra.mxu0 0.0
      %1513 = vmatprep.subr.mxu0 0.0
      %1514 = vmatpush1.xpose.msra.mxu0 0.0
      %1515 = vmatprep.subr.mxu0 0.0
      %1516 = vmatpush1.xpose.msra.mxu0 0.0
      %1517 = vmatprep.subr.mxu0 0.0
      %1518 = vmatpush1.xpose.msra.mxu0 0.0
      %1519 = vmatprep.subr.mxu0 0.0
      %1520 = vmatpush1.xpose.msra.mxu0 0.0
      %1521 = vmatprep.subr.mxu0 0.0
      %1522 = vmatpush1.xpose.msra.mxu0 0.0
      %1523 = vmatprep.subr.mxu0 0.0
      %1524 = vmatpush1.xpose.msra.mxu0 0.0
      %1525 = vmatprep.subr.mxu0 0.0
      %1526 = vmatpush1.xpose.msra.mxu0 0.0
      %1527 = vmatprep.mubr.f32.mxu0 0.0
      %v1528 = vand.u32 %v420, 4294901760
      %1529 = vmatmul.mubr.f32.gmra.mrb[0].mxu0 %v1528
      %v1530 = vpop.f32.mrb[0].mxu0
      %v1531 = vadd.f32 %v1292, %v1530
      %v1532 = vpop.f32.mrb[0].mxu0
      %1533 = vmatprep.mubr.f32.mxu0 0.0
      %v1534 = vand.u32 %v423, 4294901760
      %1535 = vmatmul.mubr.f32.gmra.mrb[0].mxu0 %v1534
      %v1536 = vpop.f32.mrb[0].mxu0
      %v1537 = vadd.f32 %v1300, %v1536
      %v1538 = vpop.f32.mrb[0].mxu0
      %1539 = vmatprep.mubr.f32.mxu0 0.0
      %v1540 = vand.u32 %v426, 4294901760
      %1541 = vmatmul.mubr.f32.gmra.mrb[0].mxu0 %v1540
      %v1542 = vpop.f32.mrb[0].mxu0
      %v1543 = vadd.f32 %v1308, %v1542
      %v1544 = vpop.f32.mrb[0].mxu0
      %1545 = vmatprep.mubr.f32.mxu0 0.0
      %v1546 = vand.u32 %v429, 4294901760
      %1547 = vmatmul.mubr.f32.gmra.mrb[0].mxu0 %v1546
      %v1548 = vpop.f32.mrb[0].mxu0
      %v1549 = vadd.f32 %v1316, %v1548
      %v1550 = vpop.f32.mrb[0].mxu0
      %1551 = vmatprep.mubr.f32.mxu0 0.0
      %v1552 = vand.u32 %v432, 4294901760
      %1553 = vmatmul.mubr.f32.gmra.mrb[0].mxu0 %v1552
      %v1554 = vpop.f32.mrb[0].mxu0
      %v1555 = vadd.f32 %v1324, %v1554
      %v1556 = vpop.f32.mrb[0].mxu0
      %1557 = vmatprep.mubr.f32.mxu0 0.0
      %v1558 = vand.u32 %v435, 4294901760
      %1559 = vmatmul.mubr.f32.gmra.mrb[0].mxu0 %v1558
      %v1560 = vpop.f32.mrb[0].mxu0
      %v1561 = vadd.f32 %v1332, %v1560
      %v1562 = vpop.f32.mrb[0].mxu0
      %1563 = vmatprep.mubr.f32.mxu0 0.0
      %v1564 = vand.u32 %v438, 4294901760
      %1565 = vmatmul.mubr.f32.gmra.mrb[0].mxu0 %v1564
      %v1566 = vpop.f32.mrb[0].mxu0
      %v1567 = vadd.f32 %v1340, %v1566
      %v1568 = vpop.f32.mrb[0].mxu0
      %1569 = vmatprep.mubr.f32.mxu0 0.0
      %v1570 = vand.u32 %v441, 4294901760
      %1571 = vmatmul.mubr.f32.gmra.mrb[0].mxu0 %v1570
      %v1572 = vpop.f32.mrb[0].mxu0
      %v1573 = vadd.f32 %v1348, %v1572
      %v1574 = vpop.f32.mrb[0].mxu0
      %1575 = vmatprep.mubr.f32.mxu0 0.0
      %v1576 = vand.u32 %v444, 4294901760
      %1577 = vmatmul.mubr.f32.gmra.mrb[0].mxu0 %v1576
      %v1578 = vpop.f32.mrb[0].mxu0
      %v1579 = vadd.f32 %v1356, %v1578
      %v1580 = vpop.f32.mrb[0].mxu0
      %1581 = vmatprep.mubr.f32.mxu0 0.0
      %v1582 = vand.u32 %v447, 4294901760
      %1583 = vmatmul.mubr.f32.gmra.mrb[0].mxu0 %v1582
      %v1584 = vpop.f32.mrb[0].mxu0
      %v1585 = vadd.f32 %v1364, %v1584
      %v1586 = vpop.f32.mrb[0].mxu0
      %1587 = vmatprep.mubr.f32.mxu0 0.0
      %v1588 = vand.u32 %v450, 4294901760
      %1589 = vmatmul.mubr.f32.gmra.mrb[0].mxu0 %v1588
      %v1590 = vpop.f32.mrb[0].mxu0
      %v1591 = vadd.f32 %v1372, %v1590
      %v1592 = vpop.f32.mrb[0].mxu0
      %1593 = vmatprep.mubr.f32.mxu0 0.0
      %v1594 = vand.u32 %v453, 4294901760
      %1595 = vmatmul.mubr.f32.gmra.mrb[0].mxu0 %v1594
      %v1596 = vpop.f32.mrb[0].mxu0
      %v1597 = vadd.f32 %v1380, %v1596
      %v1598 = vpop.f32.mrb[0].mxu0
      %1599 = vmatprep.mubr.f32.mxu0 0.0
      %v1600 = vand.u32 %v456, 4294901760
      %1601 = vmatmul.mubr.f32.gmra.mrb[0].mxu0 %v1600
      %v1602 = vpop.f32.mrb[0].mxu0
      %v1603 = vadd.f32 %v1388, %v1602
      %v1604 = vpop.f32.mrb[0].mxu0
      %1605 = vmatprep.mubr.f32.mxu0 0.0
      %v1606 = vand.u32 %v459, 4294901760
      %1607 = vmatmul.mubr.f32.gmra.mrb[0].mxu0 %v1606
      %v1608 = vpop.f32.mrb[0].mxu0
      %v1609 = vadd.f32 %v1396, %v1608
      %v1610 = vpop.f32.mrb[0].mxu0
      %1611 = vmatprep.mubr.f32.mxu0 0.0
      %v1612 = vand.u32 %v462, 4294901760
      %1613 = vmatmul.mubr.f32.gmra.mrb[0].mxu0 %v1612
      %v1614 = vpop.f32.mrb[0].mxu0
      %v1615 = vadd.f32 %v1404, %v1614
      %v1616 = vpop.f32.mrb[0].mxu0
      %1617 = vmatprep.mubr.f32.mxu0 0.0
      %v1618 = vand.u32 %v465, 4294901760
      %1619 = vmatmul.mubr.f32.gmra.mrb[0].mxu0 %v1618
      %v1620 = vpop.f32.mrb[0].mxu0
      %v1621 = vadd.f32 %v1412, %v1620
      %v1622 = vpop.f32.mrb[0].mxu0
      %1623 = vdwg.mxu0
      %1624 = vmatprep.subr.mxu0 0.0
      %v1625 = vand.u32 %v468, 4294901760
      %1626 = vmatpush1.xpose.msra.mxu0 %v1625
      %1627 = vmatprep.subr.mxu0 0.0
      %v1628 = vand.u32 %v471, 4294901760
      %1629 = vmatpush1.xpose.msra.mxu0 %v1628
      %1630 = vmatprep.subr.mxu0 0.0
      %v1631 = vand.u32 %v474, 4294901760
      %1632 = vmatpush1.xpose.msra.mxu0 %v1631
      %1633 = vmatprep.subr.mxu0 0.0
      %v1634 = vand.u32 %v477, 4294901760
      %1635 = vmatpush1.xpose.msra.mxu0 %v1634
      %1636 = vmatprep.subr.mxu0 0.0
      %v1637 = vand.u32 %v480, 4294901760
      %1638 = vmatpush1.xpose.msra.mxu0 %v1637
      %1639 = vmatprep.subr.mxu0 0.0
      %v1640 = vand.u32 %v483, 4294901760
      %1641 = vmatpush1.xpose.msra.mxu0 %v1640
      %1642 = vmatprep.subr.mxu0 0.0
      %v1643 = vand.u32 %v486, 4294901760
      %1644 = vmatpush1.xpose.msra.mxu0 %v1643
      %1645 = vmatprep.subr.mxu0 0.0
      %v1646 = vand.u32 %v489, 4294901760
      %1647 = vmatpush1.xpose.msra.mxu0 %v1646
      %1648 = vmatprep.subr.mxu0 0.0
      %v1649 = vand.u32 %v492, 4294901760
      %1650 = vmatpush1.xpose.msra.mxu0 %v1649
      %1651 = vmatprep.subr.mxu0 0.0
      %v1652 = vand.u32 %v495, 4294901760
      %1653 = vmatpush1.xpose.msra.mxu0 %v1652
      %1654 = vmatprep.subr.mxu0 0.0
      %v1655 = vand.u32 %v498, 4294901760
      %1656 = vmatpush1.xpose.msra.mxu0 %v1655
      %1657 = vmatprep.subr.mxu0 0.0
      %v1658 = vand.u32 %v501, 4294901760
      %1659 = vmatpush1.xpose.msra.mxu0 %v1658
      %1660 = vmatprep.subr.mxu0 0.0
      %v1661 = vand.u32 %v504, 4294901760
      %1662 = vmatpush1.xpose.msra.mxu0 %v1661
      %1663 = vmatprep.subr.mxu0 0.0
      %v1664 = vand.u32 %v507, 4294901760
      %1665 = vmatpush1.xpose.msra.mxu0 %v1664
      %1666 = vmatprep.subr.mxu0 0.0
      %v1667 = vand.u32 %v510, 4294901760
      %1668 = vmatpush1.xpose.msra.mxu0 %v1667
      %1669 = vmatprep.subr.mxu0 0.0
      %v1670 = vand.u32 %v513, 4294901760
      %1671 = vmatpush1.xpose.msra.mxu0 %v1670
      %1672 = vmatprep.subr.mxu0 0.0
      %1673 = vmatpush1.xpose.msra.mxu0 0.0
      %1674 = vmatprep.subr.mxu0 0.0
      %1675 = vmatpush1.xpose.msra.mxu0 0.0
      %1676 = vmatprep.subr.mxu0 0.0
      %1677 = vmatpush1.xpose.msra.mxu0 0.0
      %1678 = vmatprep.subr.mxu0 0.0
      %1679 = vmatpush1.xpose.msra.mxu0 0.0
      %1680 = vmatprep.subr.mxu0 0.0
      %1681 = vmatpush1.xpose.msra.mxu0 0.0
      %1682 = vmatprep.subr.mxu0 0.0
      %1683 = vmatpush1.xpose.msra.mxu0 0.0
      %1684 = vmatprep.subr.mxu0 0.0
      %1685 = vmatpush1.xpose.msra.mxu0 0.0
      %1686 = vmatprep.subr.mxu0 0.0
      %1687 = vmatpush1.xpose.msra.mxu0 0.0
      %1688 = vmatprep.subr.mxu0 0.0
      %1689 = vmatpush1.xpose.msra.mxu0 0.0
      %1690 = vmatprep.subr.mxu0 0.0
      %1691 = vmatpush1.xpose.msra.mxu0 0.0
      %1692 = vmatprep.subr.mxu0 0.0
      %1693 = vmatpush1.xpose.msra.mxu0 0.0
      %1694 = vmatprep.subr.mxu0 0.0
      %1695 = vmatpush1.xpose.msra.mxu0 0.0
      %1696 = vmatprep.subr.mxu0 0.0
      %1697 = vmatpush1.xpose.msra.mxu0 0.0
      %1698 = vmatprep.subr.mxu0 0.0
      %1699 = vmatpush1.xpose.msra.mxu0 0.0
      %1700 = vmatprep.subr.mxu0 0.0
      %1701 = vmatpush1.xpose.msra.mxu0 0.0
      %1702 = vmatprep.subr.mxu0 0.0
      %1703 = vmatpush1.xpose.msra.mxu0 0.0
      %1704 = vmatprep.mubr.f32.mxu0 0.0
      %v1705 = vand.u32 %v420, 4294901760
      %1706 = vmatmul.mubr.f32.gmra.mrb[0].mxu0 %v1705
      %v1707 = vpop.f32.mrb[0].mxu0
      %v1708 = vadd.f32 %v1531, %v1707
      %v1709 = vpop.f32.mrb[0].mxu0
      %1710 = vmatprep.mubr.f32.mxu0 0.0
      %v1711 = vand.u32 %v423, 4294901760
      %1712 = vmatmul.mubr.f32.gmra.mrb[0].mxu0 %v1711
      %v1713 = vpop.f32.mrb[0].mxu0
      %v1714 = vadd.f32 %v1537, %v1713
      %v1715 = vpop.f32.mrb[0].mxu0
      %1716 = vmatprep.mubr.f32.mxu0 0.0
      %v1717 = vand.u32 %v426, 4294901760
      %1718 = vmatmul.mubr.f32.gmra.mrb[0].mxu0 %v1717
      %v1719 = vpop.f32.mrb[0].mxu0
      %v1720 = vadd.f32 %v1543, %v1719
      %v1721 = vpop.f32.mrb[0].mxu0
      %1722 = vmatprep.mubr.f32.mxu0 0.0
      %v1723 = vand.u32 %v429, 4294901760
      %1724 = vmatmul.mubr.f32.gmra.mrb[0].mxu0 %v1723
      %v1725 = vpop.f32.mrb[0].mxu0
      %v1726 = vadd.f32 %v1549, %v1725
      %v1727 = vpop.f32.mrb[0].mxu0
      %1728 = vmatprep.mubr.f32.mxu0 0.0
      %v1729 = vand.u32 %v432, 4294901760
      %1730 = vmatmul.mubr.f32.gmra.mrb[0].mxu0 %v1729
      %v1731 = vpop.f32.mrb[0].mxu0
      %v1732 = vadd.f32 %v1555, %v1731
      %v1733 = vpop.f32.mrb[0].mxu0
      %1734 = vmatprep.mubr.f32.mxu0 0.0
      %v1735 = vand.u32 %v435, 4294901760
      %1736 = vmatmul.mubr.f32.gmra.mrb[0].mxu0 %v1735
      %v1737 = vpop.f32.mrb[0].mxu0
      %v1738 = vadd.f32 %v1561, %v1737
      %v1739 = vpop.f32.mrb[0].mxu0
      %1740 = vmatprep.mubr.f32.mxu0 0.0
      %v1741 = vand.u32 %v438, 4294901760
      %1742 = vmatmul.mubr.f32.gmra.mrb[0].mxu0 %v1741
      %v1743 = vpop.f32.mrb[0].mxu0
      %v1744 = vadd.f32 %v1567, %v1743
      %v1745 = vpop.f32.mrb[0].mxu0
      %1746 = vmatprep.mubr.f32.mxu0 0.0
      %v1747 = vand.u32 %v441, 4294901760
      %1748 = vmatmul.mubr.f32.gmra.mrb[0].mxu0 %v1747
      %v1749 = vpop.f32.mrb[0].mxu0
      %v1750 = vadd.f32 %v1573, %v1749
      %v1751 = vpop.f32.mrb[0].mxu0
      %1752 = vmatprep.mubr.f32.mxu0 0.0
      %v1753 = vand.u32 %v444, 4294901760
      %1754 = vmatmul.mubr.f32.gmra.mrb[0].mxu0 %v1753
      %v1755 = vpop.f32.mrb[0].mxu0
      %v1756 = vadd.f32 %v1579, %v1755
      %v1757 = vpop.f32.mrb[0].mxu0
      %1758 = vmatprep.mubr.f32.mxu0 0.0
      %v1759 = vand.u32 %v447, 4294901760
      %1760 = vmatmul.mubr.f32.gmra.mrb[0].mxu0 %v1759
      %v1761 = vpop.f32.mrb[0].mxu0
      %v1762 = vadd.f32 %v1585, %v1761
      %v1763 = vpop.f32.mrb[0].mxu0
      %1764 = vmatprep.mubr.f32.mxu0 0.0
      %v1765 = vand.u32 %v450, 4294901760
      %1766 = vmatmul.mubr.f32.gmra.mrb[0].mxu0 %v1765
      %v1767 = vpop.f32.mrb[0].mxu0
      %v1768 = vadd.f32 %v1591, %v1767
      %v1769 = vpop.f32.mrb[0].mxu0
      %1770 = vmatprep.mubr.f32.mxu0 0.0
      %v1771 = vand.u32 %v453, 4294901760
      %1772 = vmatmul.mubr.f32.gmra.mrb[0].mxu0 %v1771
      %v1773 = vpop.f32.mrb[0].mxu0
      %v1774 = vadd.f32 %v1597, %v1773
      %v1775 = vpop.f32.mrb[0].mxu0
      %1776 = vmatprep.mubr.f32.mxu0 0.0
      %v1777 = vand.u32 %v456, 4294901760
      %1778 = vmatmul.mubr.f32.gmra.mrb[0].mxu0 %v1777
      %v1779 = vpop.f32.mrb[0].mxu0
      %v1780 = vadd.f32 %v1603, %v1779
      %v1781 = vpop.f32.mrb[0].mxu0
      %1782 = vmatprep.mubr.f32.mxu0 0.0
      %v1783 = vand.u32 %v459, 4294901760
      %1784 = vmatmul.mubr.f32.gmra.mrb[0].mxu0 %v1783
      %v1785 = vpop.f32.mrb[0].mxu0
      %v1786 = vadd.f32 %v1609, %v1785
      %v1787 = vpop.f32.mrb[0].mxu0
      %1788 = vmatprep.mubr.f32.mxu0 0.0
      %v1789 = vand.u32 %v462, 4294901760
      %1790 = vmatmul.mubr.f32.gmra.mrb[0].mxu0 %v1789
      %v1791 = vpop.f32.mrb[0].mxu0
      %v1792 = vadd.f32 %v1615, %v1791
      %v1793 = vpop.f32.mrb[0].mxu0
      %1794 = vmatprep.mubr.f32.mxu0 0.0
      %v1795 = vand.u32 %v465, 4294901760
      %1796 = vmatmul.mubr.f32.gmra.mrb[0].mxu0 %v1795
      %v1797 = vpop.f32.mrb[0].mxu0
      %v1798 = vadd.f32 %v1621, %v1797
      %v1799 = vpop.f32.mrb[0].mxu0
      %1800 = vdwg.mxu0
      %v1801 = vld [vmem:[%s256] sm:$0x1]
      %v1803 = vlaneseq
      %v1804 = vshrl.u32 %v1803, 7
      %v1805 = vsub.s32 0, %v1804
      %v1806 = vrot.slane %v1801, %v1805
      %v1808 = vadd.f32 %v1708, %v1806
      %v1809 = vadd.f32 %v1714, %v1806
      %v1810 = vadd.f32 %v1720, %v1806
      %v1811 = vadd.f32 %v1726, %v1806
      %v1812 = vadd.f32 %v1732, %v1806
      %v1813 = vadd.f32 %v1738, %v1806
      %v1814 = vadd.f32 %v1744, %v1806
      %v1815 = vadd.f32 %v1750, %v1806
      %v1816 = vadd.f32 %v1756, %v1806
      %v1817 = vadd.f32 %v1762, %v1806
      %v1818 = vadd.f32 %v1768, %v1806
      %v1819 = vadd.f32 %v1774, %v1806
      %v1820 = vadd.f32 %v1780, %v1806
      %v1821 = vadd.f32 %v1786, %v1806
      %v1822 = vadd.f32 %v1792, %v1806
      %v1823 = vadd.f32 %v1798, %v1806
      %v1824 = vmax.f32 %v1808, 0.0
      %v1825 = vmax.f32 %v1809, 0.0
      %v1826 = vmax.f32 %v1810, 0.0
      %v1827 = vmax.f32 %v1811, 0.0
      %v1828 = vmax.f32 %v1812, 0.0
      %v1829 = vmax.f32 %v1813, 0.0
      %v1830 = vmax.f32 %v1814, 0.0
      %v1831 = vmax.f32 %v1815, 0.0
      %v1832 = vmax.f32 %v1816, 0.0
      %v1833 = vmax.f32 %v1817, 0.0
      %v1834 = vmax.f32 %v1818, 0.0
      %v1835 = vmax.f32 %v1819, 0.0
      %v1836 = vmax.f32 %v1820, 0.0
      %v1837 = vmax.f32 %v1821, 0.0
      %v1838 = vmax.f32 %v1822, 0.0
      %v1839 = vmax.f32 %v1823, 0.0
      %1840 = vst [vmem:[%s268] sm:$0xff] %v1824
      %1841 = vst [vmem:[%s268 + $0x8] sm:$0xff] %v1825
      %1842 = vst [vmem:[%s268 + $0x10] sm:$0xff] %v1826
      %1843 = vst [vmem:[%s268 + $0x18] sm:$0xff] %v1827
      %1844 = vst [vmem:[%s268 + $0x20] sm:$0xff] %v1828
      %1845 = vst [vmem:[%s268 + $0x28] sm:$0xff] %v1829
      %1846 = vst [vmem:[%s268 + $0x30] sm:$0xff] %v1830
      %1847 = vst [vmem:[%s268 + $0x38] sm:$0xff] %v1831
      %1848 = vst [vmem:[%s268 + $0x40] sm:$0xff] %v1832
      %1849 = vst [vmem:[%s268 + $0x48] sm:$0xff] %v1833
      %1850 = vst [vmem:[%s268 + $0x50] sm:$0xff] %v1834
      %1851 = vst [vmem:[%s268 + $0x58] sm:$0xff] %v1835
      %1852 = vst [vmem:[%s268 + $0x60] sm:$0xff] %v1836
      %1853 = vst [vmem:[%s268 + $0x68] sm:$0xff] %v1837
      %1854 = vst [vmem:[%s268 + $0x70] sm:$0xff] %v1838
      %1855 = vst [vmem:[%s268 + $0x78] sm:$0xff] %v1839
      %s1856 = smul.u32 16, %s20
      %p1857 = scmp.lt.s32.totalorder %s19, 1
      %s1858 = scalar_select %p1857, %s19, 1
      %p1859 = scmp.lt.s32.totalorder %s1856, 15
      %s1860 = scalar_select %p1859, %s1856, 15
      %p1861 = scmp.lt.s32.totalorder %s21, 0
      %s1862 = scalar_select %p1861, %s21, 0
      %s1863 = sadd.s32 %s1862, %s1860
      %s1864 = smul.addr %s1858, 16
      %s1865 = sadd.s32 %s1863, %s1864
      %s1866 = smul.addr %s1865, 8
      %s1867 = scalar_lea.vmem %s3, %s1866
      // Predicated region
      $region33: #{simmat_model.1} parent=31 // pred_check
        %p1868 = pneg %p137
      $region34: #{simmat_model.1} parent=31 // pred_check_branch
        %1870 = sbr.rel (%p1868) target = $region36
      $region35: #{simmat_model.1} parent=31 // pred_region
        %s1871 = smul.u32 16, %s20
      $region36: #{simmat_model.1} parent=31 // pred_fallthru
        _
    $region32: #{simmat_model.1} parent=5 // pred_fallthru
      _
    %p1872 = scmp.le.s32.totalorder 2, %s9
    // Predicated region
    $region37: #{simmat_model.1} parent=5 // pred_check
      %p1873 = pneg %p1872
    $region38: #{simmat_model.1} parent=5 // pred_check_branch
      %1875 = sbr.rel (%p1873) target = $region40
    $region39: #{simmat_model.1} parent=5 // pred_region
      %s1876 = ssub.s32 %s9, 2
      // Predicated region
      $region41: #{simmat_model.1} parent=39 // pred_check
        %p1877 = pneg %p143
      $region42: #{simmat_model.1} parent=39 // pred_check_branch
        %1879 = sbr.rel (%p1877) target = $region44
      $region43: #{simmat_model.1} parent=39 // pred_region
        %s1880 = smul.u32 16, %s23
        %p1881 = scmp.lt.s32.totalorder %s22, 1
        %s1882 = scalar_select %p1881, %s22, 1
        %p1883 = scmp.lt.s32.totalorder %s1880, 15
        %s1884 = scalar_select %p1883, %s1880, 15
        %p1885 = scmp.lt.s32.totalorder %s24, 0
        %s1886 = scalar_select %p1885, %s24, 0
        %s1887 = sadd.s32 %s1886, %s1884
        %s1888 = smul.addr %s1882, 16
        %s1889 = sadd.s32 %s1887, %s1888
        %s1890 = smul.addr %s1889, 8
        %s1891 = scalar_lea.vmem %s3, %s1890
      $region44: #{simmat_model.1} parent=39 // pred_fallthru
        _
    $region40: #{simmat_model.1} parent=5 // pred_fallthru
      _
  $region6: #{simmat_model.1} parent=0 // loop_footer
    %s13 = sadd.s32 1, %s9
  $region7: #{simmat_model.1} parent=0 // loop_footer_branch
    %8 = sbr.rel target = $region3
  $region8: #{simmat_model.1} parent=0 // loop_exit
    _

</llo_original>
